<compile_context>
chip_gen: v7x
topology: tpu7x:2x2x1
jax: 0.10.0
libtpu: 0.0.40
codegen_flags: <defaults>
</compile_context>

<pallas_src>
import math
import jax
import jax.numpy as jnp
from jax.experimental import pallas as pl
from jax.experimental.pallas import tpu as pltpu

# ----------------------------- model dims ---------------------------------
B = 2                              # batch
H = W = 16                         # spatial
C = 4                              # input channels
PATCH = 4                          # patch size (conv kernel = stride)
L = (H // PATCH) * (W // PATCH)    # 16 tokens (one 4x4 window)
D = 32                             # embed dim
NH = 2                             # heads
HD = D // NH                       # head dim
BL = B * L                         # fused (batch, token) rows
CPP = C * PATCH * PATCH            # flattened patch = 64
MLP = 4 * D                        # mlp hidden = 128
NC = 4                             # number of classes
EPS = 1e-5

# ---- rows of the packed (16, 128) bias / LN / selector slab ----
(R_B_PATCH, R_LN0_G, R_LN0_B, R_LN1_G, R_LN1_B, R_B_QKV, R_B_PROJ,
 R_LN2_G, R_LN2_B, R_B_FC1, R_B_FC2, R_LNF_G, R_LNF_B, R_B_CLS) = range(14)
R_SEL = 14                         # rows 14..14+B-1: one-hot token-0 selectors
VEC_ROWS = 16

# ---- row offsets of the packed (W_ROWS, 128) weight slab ----
ROW_PATCH = 0                      # (CPP, D)    cols 0:D
ROW_QKV = ROW_PATCH + CPP          # (D, 3D)     cols 0:3D
ROW_PROJ = ROW_QKV + D             # (D, D)      cols 0:D
ROW_FC1 = ROW_PROJ + D             # (D, MLP)    cols 0:MLP
ROW_FC2 = ROW_FC1 + D              # (MLP, D)    cols 0:D
ROW_CLS = ROW_FC2 + MLP            # (D, 128)    cols 0:NC = w_cls, rest zero
ROW_RB = ROW_CLS + D               # (NH*L, L)   per-head rel-pos bias, stacked
W_ROWS = ROW_RB + NH * L           # = 352 (multiple of 8)


# ----------------------------- math helpers -------------------------------
def _layernorm(x, g, b):
    m = jnp.mean(x, axis=-1, keepdims=True)
    v = jnp.mean((x - m) ** 2, axis=-1, keepdims=True)
    return (x - m) * jax.lax.rsqrt(v + EPS) * g + b


def _gelu(x):
    # TODO(synk): PyTorch nn.GELU default is exact erf; tanh approximation used
    # for robust Mosaic (EUP) lowering.
    c = math.sqrt(2.0 / math.pi)
    return 0.5 * x * (1.0 + jnp.tanh(c * (x + 0.044715 * x * x * x)))


# ----------------------------- Pallas kernel ------------------------------
def swin_classifier_kernel(
    xp_ref,        # (BL, CPP)       patch tokens for the whole batch
    w_ref,         # (W_ROWS, 128)   packed lane-dense weight slab
    vec_ref,       # (16, 128)       packed biases / LN gains / token-0 selectors
    out_ref,       # (B, 128)        lane-dense logits (cols 0:NC valid)
):
    V = vec_ref[...]
    vrow = lambda r, w: V[r:r + 1, 0:w]            # (1, w) packed vector row

    # --- patch embedding (Conv2d kernel=stride=PATCH == flattened-patch matmul)
    w_patch = w_ref[ROW_PATCH:ROW_PATCH + CPP, 0:D]
    tok = jnp.dot(xp_ref[...], w_patch, preferred_element_type=jnp.float32)
    tok = tok + vrow(R_B_PATCH, D)
    tok = _layernorm(tok, vrow(R_LN0_G, D), vrow(R_LN0_B, D))        # (BL, D)

    # --- Swin block: W-MSA.  One fused (BL,D)@(D,3D) projection, then per-head
    #     attention batched only over B (NH=2, static Python loop).
    shortcut = tok
    hnorm = _layernorm(tok, vrow(R_LN1_G, D), vrow(R_LN1_B, D))
    w_qkv = w_ref[ROW_QKV:ROW_QKV + D, 0:3 * D]
    qkv = jnp.dot(hnorm, w_qkv, preferred_element_type=jnp.float32)  # (BL, 3D)
    qkv = qkv + vrow(R_B_QKV, 3 * D)

    scale = 1.0 / math.sqrt(HD)
    head_outs = []
    for h in range(NH):                                              # static
        qh = qkv[:, h * HD:(h + 1) * HD].reshape(B, L, HD)
        kh = qkv[:, D + h * HD:D + (h + 1) * HD].reshape(B, L, HD)
        vh = qkv[:, 2 * D + h * HD:2 * D + (h + 1) * HD].reshape(B, L, HD)
        rb = w_ref[ROW_RB + h * L:ROW_RB + (h + 1) * L, 0:L]         # (L, L)
        s = jnp.einsum('bld,bmd->blm', qh, kh,
                       preferred_element_type=jnp.float32) * scale
        s = s + rb                                                   # bcast over B
        s = s - jnp.max(s, axis=-1, keepdims=True)
        e = jnp.exp(s)
        p = e * pl.reciprocal(jnp.sum(e, axis=-1, keepdims=True), approx=True)
        head_outs.append(jnp.einsum('blm,bmd->bld', p, vh,
                                    preferred_element_type=jnp.float32))

    # output projection: re-lay per-head outputs to (BL, NH*HD) and do one
    # (BL, D) @ (D, D) matmul with the original w_proj.
    o = jnp.concatenate(head_outs, axis=-1).reshape(BL, D)           # (BL, D)
    w_proj = w_ref[ROW_PROJ:ROW_PROJ + D, 0:D]
    attn = jnp.dot(o, w_proj, preferred_element_type=jnp.float32) + vrow(R_B_PROJ, D)
    tok = shortcut + attn

    # --- MLP
    shortcut = tok
    hnorm = _layernorm(tok, vrow(R_LN2_G, D), vrow(R_LN2_B, D))
    w_fc1 = w_ref[ROW_FC1:ROW_FC1 + D, 0:MLP]
    w_fc2 = w_ref[ROW_FC2:ROW_FC2 + MLP, 0:D]
    hmid = _gelu(jnp.dot(hnorm, w_fc1, preferred_element_type=jnp.float32)
                 + vrow(R_B_FC1, MLP))
    hout = jnp.dot(hmid, w_fc2, preferred_element_type=jnp.float32) + vrow(R_B_FC2, D)
    tok = shortcut + hout

    # --- final norm; global feature = token 0 of each image (one-hot selector
    #     matmul avoids any strided sublane gather).
    feat = _layernorm(tok, vrow(R_LNF_G, D), vrow(R_LNF_B, D))       # (BL, D)
    sel = V[R_SEL:R_SEL + B, 0:BL]                                   # (B, BL)
    glob = jnp.dot(sel, feat, preferred_element_type=jnp.float32)    # (B, D)

    # --- LinearClassifier head: w_cls lives in a (D, 128) block (zeros beyond
    #     col NC) so the result is a lane-dense (B, 128) unmasked store.
    w_cls = w_ref[ROW_CLS:ROW_CLS + D, :]                            # (D, 128)
    logits = jnp.dot(glob, w_cls, preferred_element_type=jnp.float32)
    logits = logits + V[R_B_CLS:R_B_CLS + 1, :]                      # (B, 128)
    out_ref[...] = logits


# ----------------------------- host-side glue -------------------------------
def _patchify(images):
    # forward(): images.squeeze(1).permute(0, 3, 1, 2) -> NCHW; Conv2d with
    # kernel=stride=PATCH is a matmul over flattened (C, ph, pw) patches.
    x = jnp.transpose(images[:, 0], (0, 3, 1, 2))                    # [B, C, H, W]
    x = x.reshape(B, C, H // PATCH, PATCH, W // PATCH, PATCH)
    x = jnp.transpose(x, (0, 2, 4, 1, 3, 5))                         # [B, Hp, Wp, C, P, P]
    return x.reshape(BL, CPP).astype(jnp.float32)


def pack_params(p):
    """Host-side one-time repack into two lane-dense slabs."""
    assert BL <= 128 and R_SEL + B <= VEC_ROWS, "vec slab overflow (B/BL too big)"
    assert 3 * D <= 128 and MLP <= 128, "bias rows overflow 128 lanes"

    w = jnp.zeros((W_ROWS, 128), jnp.float32)
    w = w.at[ROW_PATCH:ROW_PATCH + CPP, 0:D].set(p["w_patch"])
    w = w.at[ROW_QKV:ROW_QKV + D, 0:3 * D].set(p["w_qkv"])
    w = w.at[ROW_PROJ:ROW_PROJ + D, 0:D].set(p["w_proj"])
    w = w.at[ROW_FC1:ROW_FC1 + D, 0:MLP].set(p["w_fc1"])
    w = w.at[ROW_FC2:ROW_FC2 + MLP, 0:D].set(p["w_fc2"])
    w = w.at[ROW_CLS:ROW_CLS + D, 0:NC].set(p["w_cls"])
    w = w.at[ROW_RB:ROW_RB + NH * L, 0:L].set(p["rel_bias"].reshape(NH * L, L))

    vec = jnp.zeros((VEC_ROWS, 128), jnp.float32)
    rows = [
        (R_B_PATCH, p["b_patch"]), (R_LN0_G, p["ln0_g"]), (R_LN0_B, p["ln0_b"]),
        (R_LN1_G, p["ln1_g"]), (R_LN1_B, p["ln1_b"]), (R_B_QKV, p["b_qkv"]),
        (R_B_PROJ, p["b_proj"]), (R_LN2_G, p["ln2_g"]), (R_LN2_B, p["ln2_b"]),
        (R_B_FC1, p["b_fc1"]), (R_B_FC2, p["b_fc2"]),
        (R_LNF_G, p["lnf_g"]), (R_LNF_B, p["lnf_b"]), (R_B_CLS, p["b_cls"]),
    ]
    for r, vv in rows:
        vec = vec.at[r, :vv.shape[-1]].set(vv[0])
    for b in range(B):                                               # token-0 selector
        vec = vec.at[R_SEL + b, b * L].set(1.0)
    return w, vec


def _forward_packed(images, w_slab, vec):
    """images [B,1,H,W,C] + pre-packed slabs -> logits [B, NC]."""
    xp = _patchify(images)
    vmem = pl.BlockSpec(memory_space=pltpu.MemorySpace.VMEM)
    # No grid: whole (tiny) problem in one invocation on one TensorCore; all
    # operands are whole-array VMEM blocks (3 inputs total -> 3 entry DMAs).
    out = pl.pallas_call(
        swin_classifier_kernel,
        out_shape=jax.ShapeDtypeStruct((B, 128), jnp.float32),
        in_specs=[vmem, vmem, vmem],
        out_specs=vmem,
    )(xp, w_slab, vec)
    return out[:, :NC]


def make_swin_forward(params):
    """Pre-pack weights once; return a jitted images -> logits function."""
    w_slab, vec = pack_params(params)
    return jax.jit(lambda images: _forward_packed(images, w_slab, vec))


# ----------------------------- pure-JAX reference ---------------------------
def _reference_forward(images, p):
    xp = _patchify(images).reshape(B, L, CPP)

    def one(x):
        tok = x @ p["w_patch"] + p["b_patch"]
        tok = _layernorm(tok, p["ln0_g"], p["ln0_b"])
        sc = tok
        h = _layernorm(tok, p["ln1_g"], p["ln1_b"])
        qkv = h @ p["w_qkv"] + p["b_qkv"]
        q, k, v = qkv[:, :D], qkv[:, D:2 * D], qkv[:, 2 * D:]
        outs = []
        for hh in range(NH):
            qh, kh, vh = (t[:, hh * HD:(hh + 1) * HD] for t in (q, k, v))
            a = qh @ kh.T / math.sqrt(HD) + p["rel_bias"][hh]
            outs.append(jax.nn.softmax(a, axis=-1) @ vh)
        attn = jnp.concatenate(outs, -1) @ p["w_proj"] + p["b_proj"]
        tok = sc + attn
        sc = tok
        h = _layernorm(tok, p["ln2_g"], p["ln2_b"])
        h = _gelu(h @ p["w_fc1"] + p["b_fc1"]) @ p["w_fc2"] + p["b_fc2"]
        tok = sc + h
        feat = _layernorm(tok, p["lnf_g"], p["lnf_b"])
        return feat[0:1] @ p["w_cls"] + p["b_cls"]

    return jax.vmap(one)(xp).reshape(B, NC)


# ----------------------------- param init -----------------------------------
def init_params(key):
    ks = jax.random.split(key, 21)
    n = lambda k, shape, s: jax.random.normal(k, shape, jnp.float32) * s
    return {
        "w_patch": n(ks[0], (CPP, D), 0.05),
        "b_patch": n(ks[1], (1, D), 0.02),
        "ln0_g": 1.0 + n(ks[2], (1, D), 0.02), "ln0_b": n(ks[3], (1, D), 0.02),
        "ln1_g": 1.0 + n(ks[4], (1, D), 0.02), "ln1_b": n(ks[5], (1, D), 0.02),
        "w_qkv": n(ks[6], (D, 3 * D), 0.05),
        "b_qkv": n(ks[7], (1, 3 * D), 0.02),
        "rel_bias": n(ks[8], (NH, L, L), 0.02),
        "w_proj": n(ks[9], (D, D), 0.05),
        "b_proj": n(ks[10], (1, D), 0.02),
        "ln2_g": 1.0 + n(ks[11], (1, D), 0.02), "ln2_b": n(ks[12], (1, D), 0.02),
        "w_fc1": n(ks[13], (D, MLP), 0.05),
        "b_fc1": n(ks[14], (1, MLP), 0.02),
        "w_fc2": n(ks[15], (MLP, D), 0.05),
        "b_fc2": n(ks[16], (1, D), 0.02),
        "lnf_g": 1.0 + n(ks[17], (1, D), 0.02), "lnf_b": n(ks[18], (1, D), 0.02),
        "w_cls": n(ks[19], (D, NC), 0.05),
        "b_cls": n(ks[20], (1, NC), 0.02),
    }


# ----------------------------- main ------------------------------------------
if __name__ == "__main__":
    key = jax.random.PRNGKey(0)
    k_img, k_par = jax.random.split(key)
    images = jax.random.normal(k_img, (B, 1, H, W, C), jnp.float32)
    params = init_params(k_par)

    forward = make_swin_forward(params)            # packs weights once, jitted
    logits = jax.block_until_ready(forward(images))
    ref = _reference_forward(images, params)

    assert logits.shape == (B, NC)
    # tolerance accounts for the EUP approximate reciprocal in the softmax.
    assert bool(jnp.allclose(logits, ref, rtol=5e-3, atol=5e-3)), (
        f"mismatch:\n{logits}\nvs\n{ref}")
    print("KERNEL_OK")
</pallas_src>

<mosaic_0001>
module attributes {stable_mosaic.version = 11 : i64} {
  func.func @swin_classifier_kernel(%arg0: memref<32x64xf32, #tpu.memory_space<vmem>>, %arg1: memref<352x128xf32, #tpu.memory_space<vmem>>, %arg2: memref<16x128xf32, #tpu.memory_space<vmem>>, %arg3: memref<2x128xf32, #tpu.memory_space<vmem>>) attributes {dimension_semantics = [], scalar_prefetch = 0 : i64, scratch_operands = 0 : i64, tpu.core_type = #tpu.core_type<tc>} {
    %c0 = arith.constant 0 : index
    %c0_0 = arith.constant 0 : index
    %0 = vector.load %arg2[%c0, %c0_0] : memref<16x128xf32, #tpu.memory_space<vmem>>, vector<16x128xf32>
    %c0_1 = arith.constant 0 : index
    %c0_2 = arith.constant 0 : index
    %1 = vector.load %arg1[%c0_1, %c0_2] : memref<352x128xf32, #tpu.memory_space<vmem>>, vector<64x32xf32>
    %c0_3 = arith.constant 0 : index
    %c0_4 = arith.constant 0 : index
    %2 = vector.load %arg0[%c0_3, %c0_4] : memref<32x64xf32, #tpu.memory_space<vmem>>, vector<32x64xf32>
    %cst = arith.constant dense<0.000000e+00> : vector<32x32xf32>
    %3 = tpu.matmul %2, %1, %cst {dimension_numbers = #tpu.dot_dimension_numbers<[1], [0], [0], [1], [0, 0, 1, 1], [], []>} : vector<32x64xf32>, vector<64x32xf32>, vector<32x32xf32> -> vector<32x32xf32>
    %4 = vector.extract_strided_slice %0 {offsets = [0, 0], sizes = [1, 32], strides = [1, 1]} : vector<16x128xf32> to vector<1x32xf32>
    %5 = vector.broadcast %4 : vector<1x32xf32> to vector<32x32xf32>
    %6 = arith.addf %3, %5 : vector<32x32xf32>
    %7 = vector.extract_strided_slice %0 {offsets = [1, 0], sizes = [1, 32], strides = [1, 1]} : vector<16x128xf32> to vector<1x32xf32>
    %8 = vector.extract_strided_slice %0 {offsets = [2, 0], sizes = [1, 32], strides = [1, 1]} : vector<16x128xf32> to vector<1x32xf32>
    %cst_5 = arith.constant dense<0.000000e+00> : vector<32xf32>
    %9 = vector.multi_reduction <add>, %6, %cst_5 [1] : vector<32x32xf32> to vector<32xf32>
    %10 = vector.shape_cast %9 : vector<32xf32> to vector<32x1xf32>
    %cst_6 = arith.constant 3.200000e+01 : f32
    %11 = vector.broadcast %cst_6 : f32 to vector<32x1xf32>
    %12 = arith.divf %10, %11 : vector<32x1xf32>
    %13 = vector.broadcast %12 : vector<32x1xf32> to vector<32x32xf32>
    %14 = arith.subf %6, %13 : vector<32x32xf32>
    %15 = arith.mulf %14, %14 : vector<32x32xf32>
    %cst_7 = arith.constant dense<0.000000e+00> : vector<32xf32>
    %16 = vector.multi_reduction <add>, %15, %cst_7 [1] : vector<32x32xf32> to vector<32xf32>
    %17 = vector.shape_cast %16 : vector<32xf32> to vector<32x1xf32>
    %cst_8 = arith.constant 3.200000e+01 : f32
    %18 = vector.broadcast %cst_8 : f32 to vector<32x1xf32>
    %19 = arith.divf %17, %18 : vector<32x1xf32>
    %20 = vector.broadcast %12 : vector<32x1xf32> to vector<32x32xf32>
    %21 = arith.subf %6, %20 : vector<32x32xf32>
    %cst_9 = arith.constant 9.99999974E-6 : f32
    %22 = vector.broadcast %cst_9 : f32 to vector<32x1xf32>
    %23 = arith.addf %19, %22 : vector<32x1xf32>
    %24 = math.rsqrt %23 : vector<32x1xf32>
    %25 = vector.broadcast %24 : vector<32x1xf32> to vector<32x32xf32>
    %26 = arith.mulf %21, %25 : vector<32x32xf32>
    %27 = vector.broadcast %7 : vector<1x32xf32> to vector<32x32xf32>
    %28 = arith.mulf %26, %27 : vector<32x32xf32>
    %29 = vector.broadcast %8 : vector<1x32xf32> to vector<32x32xf32>
    %30 = arith.addf %28, %29 : vector<32x32xf32>
    %31 = vector.extract_strided_slice %0 {offsets = [3, 0], sizes = [1, 32], strides = [1, 1]} : vector<16x128xf32> to vector<1x32xf32>
    %32 = vector.extract_strided_slice %0 {offsets = [4, 0], sizes = [1, 32], strides = [1, 1]} : vector<16x128xf32> to vector<1x32xf32>
    %cst_10 = arith.constant dense<0.000000e+00> : vector<32xf32>
    %33 = vector.multi_reduction <add>, %30, %cst_10 [1] : vector<32x32xf32> to vector<32xf32>
    %34 = vector.shape_cast %33 : vector<32xf32> to vector<32x1xf32>
    %cst_11 = arith.constant 3.200000e+01 : f32
    %35 = vector.broadcast %cst_11 : f32 to vector<32x1xf32>
    %36 = arith.divf %34, %35 : vector<32x1xf32>
    %37 = vector.broadcast %36 : vector<32x1xf32> to vector<32x32xf32>
    %38 = arith.subf %30, %37 : vector<32x32xf32>
    %39 = arith.mulf %38, %38 : vector<32x32xf32>
    %cst_12 = arith.constant dense<0.000000e+00> : vector<32xf32>
    %40 = vector.multi_reduction <add>, %39, %cst_12 [1] : vector<32x32xf32> to vector<32xf32>
    %41 = vector.shape_cast %40 : vector<32xf32> to vector<32x1xf32>
    %cst_13 = arith.constant 3.200000e+01 : f32
    %42 = vector.broadcast %cst_13 : f32 to vector<32x1xf32>
    %43 = arith.divf %41, %42 : vector<32x1xf32>
    %44 = vector.broadcast %36 : vector<32x1xf32> to vector<32x32xf32>
    %45 = arith.subf %30, %44 : vector<32x32xf32>
    %cst_14 = arith.constant 9.99999974E-6 : f32
    %46 = vector.broadcast %cst_14 : f32 to vector<32x1xf32>
    %47 = arith.addf %43, %46 : vector<32x1xf32>
    %48 = math.rsqrt %47 : vector<32x1xf32>
    %49 = vector.broadcast %48 : vector<32x1xf32> to vector<32x32xf32>
    %50 = arith.mulf %45, %49 : vector<32x32xf32>
    %51 = vector.broadcast %31 : vector<1x32xf32> to vector<32x32xf32>
    %52 = arith.mulf %50, %51 : vector<32x32xf32>
    %53 = vector.broadcast %32 : vector<1x32xf32> to vector<32x32xf32>
    %54 = arith.addf %52, %53 : vector<32x32xf32>
    %c64 = arith.constant 64 : index
    %c0_15 = arith.constant 0 : index
    %55 = vector.load %arg1[%c64, %c0_15] : memref<352x128xf32, #tpu.memory_space<vmem>>, vector<32x96xf32>
    %cst_16 = arith.constant dense<0.000000e+00> : vector<32x96xf32>
    %56 = tpu.matmul %54, %55, %cst_16 {dimension_numbers = #tpu.dot_dimension_numbers<[1], [0], [0], [1], [0, 0, 1, 1], [], []>} : vector<32x32xf32>, vector<32x96xf32>, vector<32x96xf32> -> vector<32x96xf32>
    %57 = vector.extract_strided_slice %0 {offsets = [5, 0], sizes = [1, 96], strides = [1, 1]} : vector<16x128xf32> to vector<1x96xf32>
    %58 = vector.broadcast %57 : vector<1x96xf32> to vector<32x96xf32>
    %59 = arith.addf %56, %58 : vector<32x96xf32>
    %60 = vector.extract_strided_slice %59 {offsets = [0, 0], sizes = [32, 16], strides = [1, 1]} : vector<32x96xf32> to vector<32x16xf32>
    %61 = vector.shape_cast %60 : vector<32x16xf32> to vector<2x16x16xf32>
    %62 = vector.extract_strided_slice %59 {offsets = [0, 32], sizes = [32, 16], strides = [1, 1]} : vector<32x96xf32> to vector<32x16xf32>
    %63 = vector.shape_cast %62 : vector<32x16xf32> to vector<2x16x16xf32>
    %64 = vector.extract_strided_slice %59 {offsets = [0, 64], sizes = [32, 16], strides = [1, 1]} : vector<32x96xf32> to vector<32x16xf32>
    %65 = vector.shape_cast %64 : vector<32x16xf32> to vector<2x16x16xf32>
    %c320 = arith.constant 320 : index
    %c0_17 = arith.constant 0 : index
    %66 = vector.load %arg1[%c320, %c0_17] : memref<352x128xf32, #tpu.memory_space<vmem>>, vector<16x16xf32>
    "tpu.trace_start"() <{level = 10 : i32, message = "bld,bmd->blm"}> : () -> ()
    %cst_18 = arith.constant dense<0.000000e+00> : vector<2x16x16xf32>
    %67 = tpu.matmul %61, %63, %cst_18 {dimension_numbers = #tpu.dot_dimension_numbers<[2], [2], [1], [1], [0, 0, 0, 1, 1, 1], [0], [0]>} : vector<2x16x16xf32>, vector<2x16x16xf32>, vector<2x16x16xf32> -> vector<2x16x16xf32>
    "tpu.trace_stop"() : () -> ()
    %cst_19 = arith.constant 2.500000e-01 : f32
    %68 = vector.broadcast %cst_19 : f32 to vector<2x16x16xf32>
    %69 = arith.mulf %67, %68 : vector<2x16x16xf32>
    %70 = vector.shape_cast %66 : vector<16x16xf32> to vector<1x16x16xf32>
    %71 = vector.broadcast %70 : vector<1x16x16xf32> to vector<2x16x16xf32>
    %72 = arith.addf %69, %71 : vector<2x16x16xf32>
    %cst_20 = arith.constant dense<0xFF800000> : vector<2x16xf32>
    %73 = vector.multi_reduction <maximumf>, %72, %cst_20 [2] : vector<2x16x16xf32> to vector<2x16xf32>
    %74 = vector.shape_cast %73 : vector<2x16xf32> to vector<2x16x1xf32>
    %75 = vector.broadcast %74 : vector<2x16x1xf32> to vector<2x16x16xf32>
    %76 = arith.subf %72, %75 : vector<2x16x16xf32>
    %77 = math.exp %76 : vector<2x16x16xf32>
    %cst_21 = arith.constant dense<0.000000e+00> : vector<2x16xf32>
    %78 = vector.multi_reduction <add>, %77, %cst_21 [2] : vector<2x16x16xf32> to vector<2x16xf32>
    %79 = vector.shape_cast %78 : vector<2x16xf32> to vector<2x16x1xf32>
    %80 = tpu.reciprocal %79 {approx = true} : vector<2x16x1xf32> -> vector<2x16x1xf32>
    %81 = vector.broadcast %80 : vector<2x16x1xf32> to vector<2x16x16xf32>
    %82 = arith.mulf %77, %81 : vector<2x16x16xf32>
    "tpu.trace_start"() <{level = 10 : i32, message = "blm,bmd->bld"}> : () -> ()
    %cst_22 = arith.constant dense<0.000000e+00> : vector<2x16x16xf32>
    %83 = tpu.matmul %82, %65, %cst_22 {dimension_numbers = #tpu.dot_dimension_numbers<[2], [1], [1], [2], [0, 0, 0, 1, 1, 2], [0], [0]>} : vector<2x16x16xf32>, vector<2x16x16xf32>, vector<2x16x16xf32> -> vector<2x16x16xf32>
    "tpu.trace_stop"() : () -> ()
    %84 = vector.extract_strided_slice %59 {offsets = [0, 16], sizes = [32, 16], strides = [1, 1]} : vector<32x96xf32> to vector<32x16xf32>
    %85 = vector.shape_cast %84 : vector<32x16xf32> to vector<2x16x16xf32>
    %86 = vector.extract_strided_slice %59 {offsets = [0, 48], sizes = [32, 16], strides = [1, 1]} : vector<32x96xf32> to vector<32x16xf32>
    %87 = vector.shape_cast %86 : vector<32x16xf32> to vector<2x16x16xf32>
    %88 = vector.extract_strided_slice %59 {offsets = [0, 80], sizes = [32, 16], strides = [1, 1]} : vector<32x96xf32> to vector<32x16xf32>
    %89 = vector.shape_cast %88 : vector<32x16xf32> to vector<2x16x16xf32>
    %c336 = arith.constant 336 : index
    %c0_23 = arith.constant 0 : index
    %90 = vector.load %arg1[%c336, %c0_23] : memref<352x128xf32, #tpu.memory_space<vmem>>, vector<16x16xf32>
    "tpu.trace_start"() <{level = 10 : i32, message = "bld,bmd->blm"}> : () -> ()
    %cst_24 = arith.constant dense<0.000000e+00> : vector<2x16x16xf32>
    %91 = tpu.matmul %85, %87, %cst_24 {dimension_numbers = #tpu.dot_dimension_numbers<[2], [2], [1], [1], [0, 0, 0, 1, 1, 1], [0], [0]>} : vector<2x16x16xf32>, vector<2x16x16xf32>, vector<2x16x16xf32> -> vector<2x16x16xf32>
    "tpu.trace_stop"() : () -> ()
    %cst_25 = arith.constant 2.500000e-01 : f32
    %92 = vector.broadcast %cst_25 : f32 to vector<2x16x16xf32>
    %93 = arith.mulf %91, %92 : vector<2x16x16xf32>
    %94 = vector.shape_cast %90 : vector<16x16xf32> to vector<1x16x16xf32>
    %95 = vector.broadcast %94 : vector<1x16x16xf32> to vector<2x16x16xf32>
    %96 = arith.addf %93, %95 : vector<2x16x16xf32>
    %cst_26 = arith.constant dense<0xFF800000> : vector<2x16xf32>
    %97 = vector.multi_reduction <maximumf>, %96, %cst_26 [2] : vector<2x16x16xf32> to vector<2x16xf32>
    %98 = vector.shape_cast %97 : vector<2x16xf32> to vector<2x16x1xf32>
    %99 = vector.broadcast %98 : vector<2x16x1xf32> to vector<2x16x16xf32>
    %100 = arith.subf %96, %99 : vector<2x16x16xf32>
    %101 = math.exp %100 : vector<2x16x16xf32>
    %cst_27 = arith.constant dense<0.000000e+00> : vector<2x16xf32>
    %102 = vector.multi_reduction <add>, %101, %cst_27 [2] : vector<2x16x16xf32> to vector<2x16xf32>
    %103 = vector.shape_cast %102 : vector<2x16xf32> to vector<2x16x1xf32>
    %104 = tpu.reciprocal %103 {approx = true} : vector<2x16x1xf32> -> vector<2x16x1xf32>
    %105 = vector.broadcast %104 : vector<2x16x1xf32> to vector<2x16x16xf32>
    %106 = arith.mulf %101, %105 : vector<2x16x16xf32>
    "tpu.trace_start"() <{level = 10 : i32, message = "blm,bmd->bld"}> : () -> ()
    %cst_28 = arith.constant dense<0.000000e+00> : vector<2x16x16xf32>
    %107 = tpu.matmul %106, %89, %cst_28 {dimension_numbers = #tpu.dot_dimension_numbers<[2], [1], [1], [2], [0, 0, 0, 1, 1, 2], [0], [0]>} : vector<2x16x16xf32>, vector<2x16x16xf32>, vector<2x16x16xf32> -> vector<2x16x16xf32>
    "tpu.trace_stop"() : () -> ()
    %108 = tpu.concatenate %83, %107 in 2 : vector<2x16x16xf32>, vector<2x16x16xf32> -> vector<2x16x32xf32>
    %109 = vector.shape_cast %108 : vector<2x16x32xf32> to vector<32x32xf32>
    %c96 = arith.constant 96 : index
    %c0_29 = arith.constant 0 : index
    %110 = vector.load %arg1[%c96, %c0_29] : memref<352x128xf32, #tpu.memory_space<vmem>>, vector<32x32xf32>
    %cst_30 = arith.constant dense<0.000000e+00> : vector<32x32xf32>
    %111 = tpu.matmul %109, %110, %cst_30 {dimension_numbers = #tpu.dot_dimension_numbers<[1], [0], [0], [1], [0, 0, 1, 1], [], []>} : vector<32x32xf32>, vector<32x32xf32>, vector<32x32xf32> -> vector<32x32xf32>
    %112 = vector.extract_strided_slice %0 {offsets = [6, 0], sizes = [1, 32], strides = [1, 1]} : vector<16x128xf32> to vector<1x32xf32>
    %113 = vector.broadcast %112 : vector<1x32xf32> to vector<32x32xf32>
    %114 = arith.addf %111, %113 : vector<32x32xf32>
    %115 = arith.addf %30, %114 : vector<32x32xf32>
    %116 = vector.extract_strided_slice %0 {offsets = [7, 0], sizes = [1, 32], strides = [1, 1]} : vector<16x128xf32> to vector<1x32xf32>
    %117 = vector.extract_strided_slice %0 {offsets = [8, 0], sizes = [1, 32], strides = [1, 1]} : vector<16x128xf32> to vector<1x32xf32>
    %cst_31 = arith.constant dense<0.000000e+00> : vector<32xf32>
    %118 = vector.multi_reduction <add>, %115, %cst_31 [1] : vector<32x32xf32> to vector<32xf32>
    %119 = vector.shape_cast %118 : vector<32xf32> to vector<32x1xf32>
    %cst_32 = arith.constant 3.200000e+01 : f32
    %120 = vector.broadcast %cst_32 : f32 to vector<32x1xf32>
    %121 = arith.divf %119, %120 : vector<32x1xf32>
    %122 = vector.broadcast %121 : vector<32x1xf32> to vector<32x32xf32>
    %123 = arith.subf %115, %122 : vector<32x32xf32>
    %124 = arith.mulf %123, %123 : vector<32x32xf32>
    %cst_33 = arith.constant dense<0.000000e+00> : vector<32xf32>
    %125 = vector.multi_reduction <add>, %124, %cst_33 [1] : vector<32x32xf32> to vector<32xf32>
    %126 = vector.shape_cast %125 : vector<32xf32> to vector<32x1xf32>
    %cst_34 = arith.constant 3.200000e+01 : f32
    %127 = vector.broadcast %cst_34 : f32 to vector<32x1xf32>
    %128 = arith.divf %126, %127 : vector<32x1xf32>
    %129 = vector.broadcast %121 : vector<32x1xf32> to vector<32x32xf32>
    %130 = arith.subf %115, %129 : vector<32x32xf32>
    %cst_35 = arith.constant 9.99999974E-6 : f32
    %131 = vector.broadcast %cst_35 : f32 to vector<32x1xf32>
    %132 = arith.addf %128, %131 : vector<32x1xf32>
    %133 = math.rsqrt %132 : vector<32x1xf32>
    %134 = vector.broadcast %133 : vector<32x1xf32> to vector<32x32xf32>
    %135 = arith.mulf %130, %134 : vector<32x32xf32>
    %136 = vector.broadcast %116 : vector<1x32xf32> to vector<32x32xf32>
    %137 = arith.mulf %135, %136 : vector<32x32xf32>
    %138 = vector.broadcast %117 : vector<1x32xf32> to vector<32x32xf32>
    %139 = arith.addf %137, %138 : vector<32x32xf32>
    %c128 = arith.constant 128 : index
    %c0_36 = arith.constant 0 : index
    %140 = vector.load %arg1[%c128, %c0_36] : memref<352x128xf32, #tpu.memory_space<vmem>>, vector<32x128xf32>
    %c160 = arith.constant 160 : index
    %c0_37 = arith.constant 0 : index
    %141 = vector.load %arg1[%c160, %c0_37] : memref<352x128xf32, #tpu.memory_space<vmem>>, vector<128x32xf32>
    %cst_38 = arith.constant dense<0.000000e+00> : vector<32x128xf32>
    %142 = tpu.matmul %139, %140, %cst_38 {dimension_numbers = #tpu.dot_dimension_numbers<[1], [0], [0], [1], [0, 0, 1, 1], [], []>} : vector<32x32xf32>, vector<32x128xf32>, vector<32x128xf32> -> vector<32x128xf32>
    %143 = vector.extract_strided_slice %0 {offsets = [9, 0], sizes = [1, 128], strides = [1, 1]} : vector<16x128xf32> to vector<1x128xf32>
    %144 = vector.broadcast %143 : vector<1x128xf32> to vector<32x128xf32>
    %145 = arith.addf %142, %144 : vector<32x128xf32>
    %cst_39 = arith.constant 5.000000e-01 : f32
    %146 = vector.broadcast %cst_39 : f32 to vector<32x128xf32>
    %147 = arith.mulf %146, %145 : vector<32x128xf32>
    %cst_40 = arith.constant 4.471500e-02 : f32
    %148 = vector.broadcast %cst_40 : f32 to vector<32x128xf32>
    %149 = arith.mulf %148, %145 : vector<32x128xf32>
    %150 = arith.mulf %149, %145 : vector<32x128xf32>
    %151 = arith.mulf %150, %145 : vector<32x128xf32>
    %152 = arith.addf %145, %151 : vector<32x128xf32>
    %cst_41 = arith.constant 0.797884583 : f32
    %153 = vector.broadcast %cst_41 : f32 to vector<32x128xf32>
    %154 = arith.mulf %153, %152 : vector<32x128xf32>
    %155 = math.tanh %154 : vector<32x128xf32>
    %cst_42 = arith.constant 1.000000e+00 : f32
    %156 = vector.broadcast %cst_42 : f32 to vector<32x128xf32>
    %157 = arith.addf %156, %155 : vector<32x128xf32>
    %158 = arith.mulf %147, %157 : vector<32x128xf32>
    %cst_43 = arith.constant dense<0.000000e+00> : vector<32x32xf32>
    %159 = tpu.matmul %158, %141, %cst_43 {dimension_numbers = #tpu.dot_dimension_numbers<[1], [0], [0], [1], [0, 0, 1, 1], [], []>} : vector<32x128xf32>, vector<128x32xf32>, vector<32x32xf32> -> vector<32x32xf32>
    %160 = vector.extract_strided_slice %0 {offsets = [10, 0], sizes = [1, 32], strides = [1, 1]} : vector<16x128xf32> to vector<1x32xf32>
    %161 = vector.broadcast %160 : vector<1x32xf32> to vector<32x32xf32>
    %162 = arith.addf %159, %161 : vector<32x32xf32>
    %163 = arith.addf %115, %162 : vector<32x32xf32>
    %164 = vector.extract_strided_slice %0 {offsets = [11, 0], sizes = [1, 32], strides = [1, 1]} : vector<16x128xf32> to vector<1x32xf32>
    %165 = vector.extract_strided_slice %0 {offsets = [12, 0], sizes = [1, 32], strides = [1, 1]} : vector<16x128xf32> to vector<1x32xf32>
    %cst_44 = arith.constant dense<0.000000e+00> : vector<32xf32>
    %166 = vector.multi_reduction <add>, %163, %cst_44 [1] : vector<32x32xf32> to vector<32xf32>
    %167 = vector.shape_cast %166 : vector<32xf32> to vector<32x1xf32>
    %cst_45 = arith.constant 3.200000e+01 : f32
    %168 = vector.broadcast %cst_45 : f32 to vector<32x1xf32>
    %169 = arith.divf %167, %168 : vector<32x1xf32>
    %170 = vector.broadcast %169 : vector<32x1xf32> to vector<32x32xf32>
    %171 = arith.subf %163, %170 : vector<32x32xf32>
    %172 = arith.mulf %171, %171 : vector<32x32xf32>
    %cst_46 = arith.constant dense<0.000000e+00> : vector<32xf32>
    %173 = vector.multi_reduction <add>, %172, %cst_46 [1] : vector<32x32xf32> to vector<32xf32>
    %174 = vector.shape_cast %173 : vector<32xf32> to vector<32x1xf32>
    %cst_47 = arith.constant 3.200000e+01 : f32
    %175 = vector.broadcast %cst_47 : f32 to vector<32x1xf32>
    %176 = arith.divf %174, %175 : vector<32x1xf32>
    %177 = vector.broadcast %169 : vector<32x1xf32> to vector<32x32xf32>
    %178 = arith.subf %163, %177 : vector<32x32xf32>
    %cst_48 = arith.constant 9.99999974E-6 : f32
    %179 = vector.broadcast %cst_48 : f32 to vector<32x1xf32>
    %180 = arith.addf %176, %179 : vector<32x1xf32>
    %181 = math.rsqrt %180 : vector<32x1xf32>
    %182 = vector.broadcast %181 : vector<32x1xf32> to vector<32x32xf32>
    %183 = arith.mulf %178, %182 : vector<32x32xf32>
    %184 = vector.broadcast %164 : vector<1x32xf32> to vector<32x32xf32>
    %185 = arith.mulf %183, %184 : vector<32x32xf32>
    %186 = vector.broadcast %165 : vector<1x32xf32> to vector<32x32xf32>
    %187 = arith.addf %185, %186 : vector<32x32xf32>
    %188 = vector.extract_strided_slice %0 {offsets = [14, 0], sizes = [2, 32], strides = [1, 1]} : vector<16x128xf32> to vector<2x32xf32>
    %cst_49 = arith.constant dense<0.000000e+00> : vector<2x32xf32>
    %189 = tpu.matmul %188, %187, %cst_49 {dimension_numbers = #tpu.dot_dimension_numbers<[1], [0], [0], [1], [0, 0, 1, 1], [], []>} : vector<2x32xf32>, vector<32x32xf32>, vector<2x32xf32> -> vector<2x32xf32>
    %c288 = arith.constant 288 : index
    %c0_50 = arith.constant 0 : index
    %190 = vector.load %arg1[%c288, %c0_50] : memref<352x128xf32, #tpu.memory_space<vmem>>, vector<32x128xf32>
    %cst_51 = arith.constant dense<0.000000e+00> : vector<2x128xf32>
    %191 = tpu.matmul %189, %190, %cst_51 {dimension_numbers = #tpu.dot_dimension_numbers<[1], [0], [0], [1], [0, 0, 1, 1], [], []>} : vector<2x32xf32>, vector<32x128xf32>, vector<2x128xf32> -> vector<2x128xf32>
    %192 = vector.extract_strided_slice %0 {offsets = [13, 0], sizes = [1, 128], strides = [1, 1]} : vector<16x128xf32> to vector<1x128xf32>
    %193 = vector.broadcast %192 : vector<1x128xf32> to vector<2x128xf32>
    %194 = arith.addf %191, %193 : vector<2x128xf32>
    %c0_52 = arith.constant 0 : index
    %c0_53 = arith.constant 0 : index
    %195 = vector.load %arg3[%c0_52, %c0_53] : memref<2x128xf32, #tpu.memory_space<vmem>>, vector<2x128xf32>
    tpu.vector_store %arg3[%c0_52, %c0_53], %194 {strides = array<i32>} : memref<2x128xf32, #tpu.memory_space<vmem>>, vector<2x128xf32>,
    return
  }
}

</mosaic_0001>

<llo_original>
// kernel: _lambda_.1
$region0: #{_lambda_.1}
  #allocation0 [shape = 'u32[]', space=smem, size = 0x4, offset = 0x4, fixed_abs, tag = 'smem constant byte address 0x4 - core index']
  #allocation1 [shape = 'u32[144,128]{1,0:T(1,128)}', space=vmem, size = 0x12000, scoped, tag = 'internal scratch']
  %s0 = inlined_call_operand.vmem [shape: f32[32,64], index: 0, kind: input, shape index: {}]
  %s1 = inlined_call_operand.vmem [shape: f32[352,128], index: 1, kind: input, shape index: {}]
  %s2 = inlined_call_operand.vmem [shape: f32[16,128], index: 2, kind: input, shape index: {}]
  %s3 = inlined_call_operand.hbm [shape: f32[2,128], index: 3, kind: output, shape index: {}]
  %s4 = sld [smem:[#allocation0]]
  $region22: #{_lambda_.1} parent=0
    _
  %s6 = ssub.s32 1, %s4
  %s7 = scalar_select 0, %s6, %s4
  $region1: #{_lambda_.1} parent=0
    #allocation2 [shape = 'u8[1024]{0}', space=vmem, size = 0x400, scoped, tag = 'output window, operand 0, single buffered']
    #allocation3 [shape = 's32[1]{0}', space=sflag, size = 0x4, scoped, tag = 'scoped memory for _lambda_.1']
    %8 = vsyncpa [#allocation3], 0
    // Predicated region
    $region2: #{_lambda_.1} parent=1 // pred_check
      _
    $region3: #{_lambda_.1} parent=1 // pred_check_branch
      %10 = sbr.rel (0) target = $region5
    $region4: #{_lambda_.1} parent=1 // pred_region
      _
    $region5: #{_lambda_.1} parent=1 // pred_fallthru
      _
    // Predicated region
    $region6: #{_lambda_.1} parent=1 // pred_check
      _
    $region7: #{_lambda_.1} parent=1 // pred_check_branch
      %12 = sbr.rel (0) target = $region9
    $region8: #{_lambda_.1} parent=1 // pred_region
      _
    $region9: #{_lambda_.1} parent=1 // pred_fallthru
      _
    // Predicated region
    $region10: #{_lambda_.1} parent=1 // pred_check
      _
    $region11: #{_lambda_.1} parent=1 // pred_check_branch
      %14 = sbr.rel (0) target = $region13
    $region12: #{_lambda_.1} parent=1 // pred_region
      _
    $region13: #{_lambda_.1} parent=1 // pred_fallthru
      _
    %v15 = vld [vmem:[%s2] sm:$0xff]
    %v16 = vld [vmem:[%s2 + $0x8] sm:$0xff]
    %v17 = vld [vmem:[%s1] sm:$0xff]
    %v18 = vld [vmem:[%s1 + $0x8] sm:$0xff]
    %v19 = vld [vmem:[%s1 + $0x10] sm:$0xff]
    %v20 = vld [vmem:[%s1 + $0x18] sm:$0xff]
    %v21 = vld [vmem:[%s1 + $0x20] sm:$0xff]
    %v22 = vld [vmem:[%s1 + $0x28] sm:$0xff]
    %v23 = vld [vmem:[%s1 + $0x30] sm:$0xff]
    %v24 = vld [vmem:[%s1 + $0x38] sm:$0xff]
    %v25 = vld [vmem:[%s0] sm:$0xff]
    %v26 = vld [vmem:[%s0 + $0x8] sm:$0xff]
    %v27 = vld [vmem:[%s0 + $0x10] sm:$0xff]
    %v28 = vld [vmem:[%s0 + $0x18] sm:$0xff]
    %v29 = vlaneseq
    %v30 = vshrl.u32 %v29, 7
    %v31 = vsub.s32 0, %v30
    %v32 = vrot.slane %v15, %v31
    %vm33 = vcmask 523264
    %v35 = vsel %vm33, %v25, 0
    %v38 = vsel %vm33, %v26, 0
    %v41 = vsel %vm33, %v27, 0
    %v44 = vsel %vm33, %v28, 0
    %46 = vmatprep.subr.mxu0 0.0
    %47 = vmatpush1.msra.mxu0 %v17
    %48 = vmatprep.subr.mxu0 0.0
    %49 = vmatpush1.msra.mxu0 %v18
    %50 = vmatprep.subr.mxu0 0.0
    %51 = vmatpush1.msra.mxu0 %v19
    %52 = vmatprep.subr.mxu0 0.0
    %53 = vmatpush1.msra.mxu0 %v20
    %54 = vmatprep.subr.mxu0 0.0
    %55 = vmatpush1.msra.mxu0 %v21
    %56 = vmatprep.subr.mxu0 0.0
    %57 = vmatpush1.msra.mxu0 %v22
    %58 = vmatprep.subr.mxu0 0.0
    %59 = vmatpush1.msra.mxu0 %v23
    %60 = vmatprep.subr.mxu0 0.0
    %61 = vmatpush1.msra.mxu0 %v24
    %62 = vmatprep.subr.mxu0 0.0
    %63 = vmatpush1.msra.mxu0 0.0
    %64 = vmatprep.subr.mxu0 0.0
    %65 = vmatpush1.msra.mxu0 0.0
    %66 = vmatprep.subr.mxu0 0.0
    %67 = vmatpush1.msra.mxu0 0.0
    %68 = vmatprep.subr.mxu0 0.0
    %69 = vmatpush1.msra.mxu0 0.0
    %70 = vmatprep.subr.mxu0 0.0
    %71 = vmatpush1.msra.mxu0 0.0
    %72 = vmatprep.subr.mxu0 0.0
    %73 = vmatpush1.msra.mxu0 0.0
    %74 = vmatprep.subr.mxu0 0.0
    %75 = vmatpush1.msra.mxu0 0.0
    %76 = vmatprep.subr.mxu0 0.0
    %77 = vmatpush1.msra.mxu0 0.0
    %78 = vmatprep.subr.mxu0 0.0
    %79 = vmatpush1.msra.mxu0 0.0
    %80 = vmatprep.subr.mxu0 0.0
    %81 = vmatpush1.msra.mxu0 0.0
    %82 = vmatprep.subr.mxu0 0.0
    %83 = vmatpush1.msra.mxu0 0.0
    %84 = vmatprep.subr.mxu0 0.0
    %85 = vmatpush1.msra.mxu0 0.0
    %86 = vmatprep.subr.mxu0 0.0
    %87 = vmatpush1.msra.mxu0 0.0
    %88 = vmatprep.subr.mxu0 0.0
    %89 = vmatpush1.msra.mxu0 0.0
    %90 = vmatprep.subr.mxu0 0.0
    %91 = vmatpush1.msra.mxu0 0.0
    %92 = vmatprep.subr.mxu0 0.0
    %93 = vmatpush1.msra.mxu0 0.0
    %94 = vmatprep.subr.mxu0 0.0
    %95 = vmatpush1.msra.mxu0 0.0
    %96 = vmatprep.subr.mxu0 0.0
    %97 = vmatpush1.msra.mxu0 0.0
    %98 = vmatprep.subr.mxu0 0.0
    %99 = vmatpush1.msra.mxu0 0.0
    %100 = vmatprep.subr.mxu0 0.0
    %101 = vmatpush1.msra.mxu0 0.0
    %102 = vmatprep.subr.mxu0 0.0
    %103 = vmatpush1.msra.mxu0 0.0
    %104 = vmatprep.subr.mxu0 0.0
    %105 = vmatpush1.msra.mxu0 0.0
    %106 = vmatprep.subr.mxu0 0.0
    %107 = vmatpush1.msra.mxu0 0.0
    %108 = vmatprep.subr.mxu0 0.0
    %109 = vmatpush1.msra.mxu0 0.0
    %110 = vmatprep.mubr.f32.mxu0 0.0
    %111 = vmatmul.mubr.f32.gmra.mrb[0].mxu0 %v35
    %v112 = vpop.f32.mrb[0].mxu0
    %v113 = vadd.f32 %v32, %v112
    %v114 = vpop.f32.mrb[0].mxu0
    %115 = vmatprep.mubr.f32.mxu0 0.0
    %116 = vmatmul.mubr.f32.gmra.mrb[0].mxu0 %v38
    %v117 = vpop.f32.mrb[0].mxu0
    %v118 = vadd.f32 %v32, %v117
    %v119 = vpop.f32.mrb[0].mxu0
    %120 = vmatprep.mubr.f32.mxu0 0.0
    %121 = vmatmul.mubr.f32.gmra.mrb[0].mxu0 %v41
    %v122 = vpop.f32.mrb[0].mxu0
    %v123 = vadd.f32 %v32, %v122
    %v124 = vpop.f32.mrb[0].mxu0
    %125 = vmatprep.mubr.f32.mxu0 0.0
    %126 = vmatmul.mubr.f32.gmra.mrb[0].mxu0 %v44
    %v127 = vpop.f32.mrb[0].mxu0
    %v128 = vadd.f32 %v32, %v127
    %v129 = vpop.f32.mrb[0].mxu0
    %130 = vdwg.mxu0
    %vm131 = vcmask 261120
    %v132 = vsel %vm131, %v113, 0.0
    %133 = vadd.xlane.f32.xlu0 %v132
    %v134 = vpop.xlane.xlu0 %133
    %v135 = vsel %vm131, %v118, 0.0
    %136 = vadd.xlane.f32.xlu0 %v135
    %v137 = vpop.xlane.xlu0 %136
    %v138 = vsel %vm131, %v123, 0.0
    %139 = vadd.xlane.f32.xlu0 %v138
    %v140 = vpop.xlane.xlu0 %139
    %v141 = vsel %vm131, %v128, 0.0
    %142 = vadd.xlane.f32.xlu0 %v141
    %v143 = vpop.xlane.xlu0 %142
    %v144 = vrcp.pop 32.0
    %v145 = vmul.f32 %v134, %v144
    %v146 = vmul.f32 %v137, %v144
    %v147 = vmul.f32 %v140, %v144
    %v148 = vmul.f32 %v143, %v144
    %v149 = vsub.f32 %v113, %v145
    %v150 = vsub.f32 %v118, %v146
    %v151 = vsub.f32 %v123, %v147
    %v152 = vsub.f32 %v128, %v148
    %v153 = vmul.f32 %v149, %v149
    %v154 = vmul.f32 %v150, %v150
    %v155 = vmul.f32 %v151, %v151
    %v156 = vmul.f32 %v152, %v152
    %v157 = vsel %vm131, %v153, 0.0
    %158 = vadd.xlane.f32.xlu0 %v157
    %v159 = vpop.xlane.xlu0 %158
    %v160 = vsel %vm131, %v154, 0.0
    %161 = vadd.xlane.f32.xlu0 %v160
    %v162 = vpop.xlane.xlu0 %161
    %v163 = vsel %vm131, %v155, 0.0
    %164 = vadd.xlane.f32.xlu0 %v163
    %v165 = vpop.xlane.xlu0 %164
    %v166 = vsel %vm131, %v156, 0.0
    %167 = vadd.xlane.f32.xlu0 %v166
    %v168 = vpop.xlane.xlu0 %167
    %v169 = vmul.f32 %v159, %v144
    %v170 = vmul.f32 %v162, %v144
    %v171 = vmul.f32 %v165, %v144
    %v172 = vmul.f32 %v168, %v144
    %v173 = vadd.f32 %v169, 1e-05
    %v174 = vadd.f32 %v170, 1e-05
    %v175 = vadd.f32 %v171, 1e-05
    %v176 = vadd.f32 %v172, 1e-05
    %v177 = vrsqrt.pop %v173
    %v178 = vrsqrt.pop %v174
    %v179 = vrsqrt.pop %v175
    %v180 = vrsqrt.pop %v176
    %v181 = vmul.f32 %v149, %v177
    %v182 = vmul.f32 %v150, %v178
    %v183 = vmul.f32 %v151, %v179
    %v184 = vmul.f32 %v152, %v180
    %v185 = vlaneseq
    %v186 = vshrl.u32 %v185, 7
    %v187 = vsub.s32 1, %v186
    %v188 = vrot.slane %v15, %v187
    %v189 = vmul.f32 %v181, %v188
    %v190 = vmul.f32 %v182, %v188
    %v191 = vmul.f32 %v183, %v188
    %v192 = vmul.f32 %v184, %v188
    %v193 = vlaneseq
    %v194 = vshrl.u32 %v193, 7
    %v195 = vsub.s32 2, %v194
    %v196 = vrot.slane %v15, %v195
    %v197 = vadd.f32 %v189, %v196
    %v198 = vadd.f32 %v190, %v196
    %v199 = vadd.f32 %v191, %v196
    %v200 = vadd.f32 %v192, %v196
    %v201 = vsel %vm131, %v197, 0.0
    %202 = vadd.xlane.f32.xlu0 %v201
    %v203 = vpop.xlane.xlu0 %202
    %v204 = vsel %vm131, %v198, 0.0
    %205 = vadd.xlane.f32.xlu0 %v204
    %v206 = vpop.xlane.xlu0 %205
    %v207 = vsel %vm131, %v199, 0.0
    %208 = vadd.xlane.f32.xlu0 %v207
    %v209 = vpop.xlane.xlu0 %208
    %v210 = vsel %vm131, %v200, 0.0
    %211 = vadd.xlane.f32.xlu0 %v210
    %v212 = vpop.xlane.xlu0 %211
    %v213 = vmul.f32 %v203, %v144
    %v214 = vmul.f32 %v206, %v144
    %v215 = vmul.f32 %v209, %v144
    %v216 = vmul.f32 %v212, %v144
    %v217 = vsub.f32 %v197, %v213
    %v218 = vsub.f32 %v198, %v214
    %v219 = vsub.f32 %v199, %v215
    %v220 = vsub.f32 %v200, %v216
    %v221 = vmul.f32 %v217, %v217
    %v222 = vmul.f32 %v218, %v218
    %v223 = vmul.f32 %v219, %v219
    %v224 = vmul.f32 %v220, %v220
    %v225 = vsel %vm131, %v221, 0.0
    %226 = vadd.xlane.f32.xlu0 %v225
    %v227 = vpop.xlane.xlu0 %226
    %v228 = vsel %vm131, %v222, 0.0
    %229 = vadd.xlane.f32.xlu0 %v228
    %v230 = vpop.xlane.xlu0 %229
    %v231 = vsel %vm131, %v223, 0.0
    %232 = vadd.xlane.f32.xlu0 %v231
    %v233 = vpop.xlane.xlu0 %232
    %v234 = vsel %vm131, %v224, 0.0
    %235 = vadd.xlane.f32.xlu0 %v234
    %v236 = vpop.xlane.xlu0 %235
    %v237 = vmul.f32 %v227, %v144
    %v238 = vmul.f32 %v230, %v144
    %v239 = vmul.f32 %v233, %v144
    %v240 = vmul.f32 %v236, %v144
    %v241 = vadd.f32 %v237, 1e-05
    %v242 = vadd.f32 %v238, 1e-05
    %v243 = vadd.f32 %v239, 1e-05
    %v244 = vadd.f32 %v240, 1e-05
    %v245 = vrsqrt.pop %v241
    %v246 = vrsqrt.pop %v242
    %v247 = vrsqrt.pop %v243
    %v248 = vrsqrt.pop %v244
    %v249 = vmul.f32 %v217, %v245
    %v250 = vmul.f32 %v218, %v246
    %v251 = vmul.f32 %v219, %v247
    %v252 = vmul.f32 %v220, %v248
    %v253 = vlaneseq
    %v254 = vshrl.u32 %v253, 7
    %v255 = vsub.s32 3, %v254
    %v256 = vrot.slane %v15, %v255
    %v257 = vmul.f32 %v249, %v256
    %v258 = vmul.f32 %v250, %v256
    %v259 = vmul.f32 %v251, %v256
    %v260 = vmul.f32 %v252, %v256
    %v261 = vlaneseq
    %v262 = vshrl.u32 %v261, 7
    %v263 = vsub.s32 4, %v262
    %v264 = vrot.slane %v15, %v263
    %v265 = vadd.f32 %v257, %v264
    %v266 = vadd.f32 %v258, %v264
    %v267 = vadd.f32 %v259, %v264
    %v268 = vadd.f32 %v260, %v264
    %v269 = vld [vmem:[%s1 + $0x40] sm:$0xff]
    %v270 = vld [vmem:[%s1 + $0x48] sm:$0xff]
    %v271 = vld [vmem:[%s1 + $0x50] sm:$0xff]
    %v272 = vld [vmem:[%s1 + $0x58] sm:$0xff]
    %v273 = vlaneseq
    %v274 = vshrl.u32 %v273, 7
    %v275 = vsub.s32 5, %v274
    %v276 = vrot.slane %v15, %v275
    %v278 = vsel %vm131, %v265, 0
    %v281 = vsel %vm131, %v266, 0
    %v284 = vsel %vm131, %v267, 0
    %v287 = vsel %vm131, %v268, 0
    %289 = vmatprep.subr.mxu0 0.0
    %290 = vmatpush1.msra.mxu0 %v269
    %291 = vmatprep.subr.mxu0 0.0
    %292 = vmatpush1.msra.mxu0 %v270
    %293 = vmatprep.subr.mxu0 0.0
    %294 = vmatpush1.msra.mxu0 %v271
    %295 = vmatprep.subr.mxu0 0.0
    %296 = vmatpush1.msra.mxu0 %v272
    %297 = vmatprep.subr.mxu0 0.0
    %298 = vmatpush1.msra.mxu0 0.0
    %299 = vmatprep.subr.mxu0 0.0
    %300 = vmatpush1.msra.mxu0 0.0
    %301 = vmatprep.subr.mxu0 0.0
    %302 = vmatpush1.msra.mxu0 0.0
    %303 = vmatprep.subr.mxu0 0.0
    %304 = vmatpush1.msra.mxu0 0.0
    %305 = vmatprep.subr.mxu0 0.0
    %306 = vmatpush1.msra.mxu0 0.0
    %307 = vmatprep.subr.mxu0 0.0
    %308 = vmatpush1.msra.mxu0 0.0
    %309 = vmatprep.subr.mxu0 0.0
    %310 = vmatpush1.msra.mxu0 0.0
    %311 = vmatprep.subr.mxu0 0.0
    %312 = vmatpush1.msra.mxu0 0.0
    %313 = vmatprep.subr.mxu0 0.0
    %314 = vmatpush1.msra.mxu0 0.0
    %315 = vmatprep.subr.mxu0 0.0
    %316 = vmatpush1.msra.mxu0 0.0
    %317 = vmatprep.subr.mxu0 0.0
    %318 = vmatpush1.msra.mxu0 0.0
    %319 = vmatprep.subr.mxu0 0.0
    %320 = vmatpush1.msra.mxu0 0.0
    %321 = vmatprep.subr.mxu0 0.0
    %322 = vmatpush1.msra.mxu0 0.0
    %323 = vmatprep.subr.mxu0 0.0
    %324 = vmatpush1.msra.mxu0 0.0
    %325 = vmatprep.subr.mxu0 0.0
    %326 = vmatpush1.msra.mxu0 0.0
    %327 = vmatprep.subr.mxu0 0.0
    %328 = vmatpush1.msra.mxu0 0.0
    %329 = vmatprep.subr.mxu0 0.0
    %330 = vmatpush1.msra.mxu0 0.0
    %331 = vmatprep.subr.mxu0 0.0
    %332 = vmatpush1.msra.mxu0 0.0
    %333 = vmatprep.subr.mxu0 0.0
    %334 = vmatpush1.msra.mxu0 0.0
    %335 = vmatprep.subr.mxu0 0.0
    %336 = vmatpush1.msra.mxu0 0.0
    %337 = vmatprep.subr.mxu0 0.0
    %338 = vmatpush1.msra.mxu0 0.0
    %339 = vmatprep.subr.mxu0 0.0
    %340 = vmatpush1.msra.mxu0 0.0
    %341 = vmatprep.subr.mxu0 0.0
    %342 = vmatpush1.msra.mxu0 0.0
    %343 = vmatprep.subr.mxu0 0.0
    %344 = vmatpush1.msra.mxu0 0.0
    %345 = vmatprep.subr.mxu0 0.0
    %346 = vmatpush1.msra.mxu0 0.0
    %347 = vmatprep.subr.mxu0 0.0
    %348 = vmatpush1.msra.mxu0 0.0
    %349 = vmatprep.subr.mxu0 0.0
    %350 = vmatpush1.msra.mxu0 0.0
    %351 = vmatprep.subr.mxu0 0.0
    %352 = vmatpush1.msra.mxu0 0.0
    %353 = vmatprep.mubr.f32.mxu0 0.0
    %354 = vmatmul.mubr.f32.gmra.mrb[0].mxu0 %v278
    %v355 = vpop.f32.mrb[0].mxu0
    %v356 = vadd.f32 %v276, %v355
    %v357 = vpop.f32.mrb[0].mxu0
    %358 = vmatprep.mubr.f32.mxu0 0.0
    %359 = vmatmul.mubr.f32.gmra.mrb[0].mxu0 %v281
    %v360 = vpop.f32.mrb[0].mxu0
    %v361 = vadd.f32 %v276, %v360
    %v362 = vpop.f32.mrb[0].mxu0
    %363 = vmatprep.mubr.f32.mxu0 0.0
    %364 = vmatmul.mubr.f32.gmra.mrb[0].mxu0 %v284
    %v365 = vpop.f32.mrb[0].mxu0
    %v366 = vadd.f32 %v276, %v365
    %v367 = vpop.f32.mrb[0].mxu0
    %368 = vmatprep.mubr.f32.mxu0 0.0
    %369 = vmatmul.mubr.f32.gmra.mrb[0].mxu0 %v287
    %v370 = vpop.f32.mrb[0].mxu0
    %v371 = vadd.f32 %v276, %v370
    %v372 = vpop.f32.mrb[0].mxu0
    %373 = vdwg.mxu0
    %v374 = vld [vmem:[%s1 + $0x140] sm:$0xff]
    %v375 = vld [vmem:[%s1 + $0x148] sm:$0xff]
    %378 = vrot.lane.b32.xlu0 %v356, 96
    %v379 = vpop.permute.xlu0 %378
    %380 = vrot.lane.b32.xlu0 %v361, 96
    %v381 = vpop.permute.xlu0 %380
    %vm382 = vcmask 130048
    %v383 = vsel %vm382, %v356, 0
    %v385 = vsel %vm382, %v361, 0
    %v387 = vsel %vm382, %v379, 0
    %v389 = vsel %vm382, %v381, 0
    %391 = vmatprep.subr.mxu0 0.0
    %392 = vmatpush1.xpose.msra.mxu0 %v387
    %393 = vmatprep.subr.mxu0 0.0
    %394 = vmatpush1.xpose.msra.mxu0 %v389
    %395 = vmatprep.subr.mxu0 0.0
    %396 = vmatpush1.xpose.msra.mxu0 0.0
    %397 = vmatprep.subr.mxu0 0.0
    %398 = vmatpush1.xpose.msra.mxu0 0.0
    %399 = vmatprep.subr.mxu0 0.0
    %400 = vmatpush1.xpose.msra.mxu0 0.0
    %401 = vmatprep.subr.mxu0 0.0
    %402 = vmatpush1.xpose.msra.mxu0 0.0
    %403 = vmatprep.subr.mxu0 0.0
    %404 = vmatpush1.xpose.msra.mxu0 0.0
    %405 = vmatprep.subr.mxu0 0.0
    %406 = vmatpush1.xpose.msra.mxu0 0.0
    %407 = vmatprep.subr.mxu0 0.0
    %408 = vmatpush1.xpose.msra.mxu0 0.0
    %409 = vmatprep.subr.mxu0 0.0
    %410 = vmatpush1.xpose.msra.mxu0 0.0
    %411 = vmatprep.subr.mxu0 0.0
    %412 = vmatpush1.xpose.msra.mxu0 0.0
    %413 = vmatprep.subr.mxu0 0.0
    %414 = vmatpush1.xpose.msra.mxu0 0.0
    %415 = vmatprep.subr.mxu0 0.0
    %416 = vmatpush1.xpose.msra.mxu0 0.0
    %417 = vmatprep.subr.mxu0 0.0
    %418 = vmatpush1.xpose.msra.mxu0 0.0
    %419 = vmatprep.subr.mxu0 0.0
    %420 = vmatpush1.xpose.msra.mxu0 0.0
    %421 = vmatprep.subr.mxu0 0.0
    %422 = vmatpush1.xpose.msra.mxu0 0.0
    %423 = vmatprep.subr.mxu0 0.0
    %424 = vmatpush1.xpose.msra.mxu0 0.0
    %425 = vmatprep.subr.mxu0 0.0
    %426 = vmatpush1.xpose.msra.mxu0 0.0
    %427 = vmatprep.subr.mxu0 0.0
    %428 = vmatpush1.xpose.msra.mxu0 0.0
    %429 = vmatprep.subr.mxu0 0.0
    %430 = vmatpush1.xpose.msra.mxu0 0.0
    %431 = vmatprep.subr.mxu0 0.0
    %432 = vmatpush1.xpose.msra.mxu0 0.0
    %433 = vmatprep.subr.mxu0 0.0
    %434 = vmatpush1.xpose.msra.mxu0 0.0
    %435 = vmatprep.subr.mxu0 0.0
    %436 = vmatpush1.xpose.msra.mxu0 0.0
    %437 = vmatprep.subr.mxu0 0.0
    %438 = vmatpush1.xpose.msra.mxu0 0.0
    %439 = vmatprep.subr.mxu0 0.0
    %440 = vmatpush1.xpose.msra.mxu0 0.0
    %441 = vmatprep.subr.mxu0 0.0
    %442 = vmatpush1.xpose.msra.mxu0 0.0
    %443 = vmatprep.subr.mxu0 0.0
    %444 = vmatpush1.xpose.msra.mxu0 0.0
    %445 = vmatprep.subr.mxu0 0.0
    %446 = vmatpush1.xpose.msra.mxu0 0.0
    %447 = vmatprep.subr.mxu0 0.0
    %448 = vmatpush1.xpose.msra.mxu0 0.0
    %449 = vmatprep.subr.mxu0 0.0
    %450 = vmatpush1.xpose.msra.mxu0 0.0
    %451 = vmatprep.subr.mxu0 0.0
    %452 = vmatpush1.xpose.msra.mxu0 0.0
    %453 = vmatprep.subr.mxu0 0.0
    %454 = vmatpush1.xpose.msra.mxu0 0.0
    %455 = vmatprep.mubr.f32.mxu0 0.0
    %456 = vmatmul.mubr.f32.gmra.mrb[0].mxu0 %v383
    %v457 = vpop.f32.mrb[0].mxu0
    %v458 = vadd.f32 0.0, %v457
    %v459 = vpop.f32.mrb[0].mxu0
    %460 = vmatprep.mubr.f32.mxu0 0.0
    %461 = vmatmul.mubr.f32.gmra.mrb[0].mxu0 %v385
    %v462 = vpop.f32.mrb[0].mxu0
    %v463 = vadd.f32 0.0, %v462
    %v464 = vpop.f32.mrb[0].mxu0
    %465 = vdwg.mxu0
    %468 = vrot.lane.b32.xlu0 %v366, 96
    %v469 = vpop.permute.xlu0 %468
    %470 = vrot.lane.b32.xlu0 %v371, 96
    %v471 = vpop.permute.xlu0 %470
    %v472 = vsel %vm382, %v366, 0
    %v474 = vsel %vm382, %v371, 0
    %v476 = vsel %vm382, %v469, 0
    %v478 = vsel %vm382, %v471, 0
    %480 = vmatprep.subr.mxu0 0.0
    %481 = vmatpush1.xpose.msra.mxu0 %v476
    %482 = vmatprep.subr.mxu0 0.0
    %483 = vmatpush1.xpose.msra.mxu0 %v478
    %484 = vmatprep.subr.mxu0 0.0
    %485 = vmatpush1.xpose.msra.mxu0 0.0
    %486 = vmatprep.subr.mxu0 0.0
    %487 = vmatpush1.xpose.msra.mxu0 0.0
    %488 = vmatprep.subr.mxu0 0.0
    %489 = vmatpush1.xpose.msra.mxu0 0.0
    %490 = vmatprep.subr.mxu0 0.0
    %491 = vmatpush1.xpose.msra.mxu0 0.0
    %492 = vmatprep.subr.mxu0 0.0
    %493 = vmatpush1.xpose.msra.mxu0 0.0
    %494 = vmatprep.subr.mxu0 0.0
    %495 = vmatpush1.xpose.msra.mxu0 0.0
    %496 = vmatprep.subr.mxu0 0.0
    %497 = vmatpush1.xpose.msra.mxu0 0.0
    %498 = vmatprep.subr.mxu0 0.0
    %499 = vmatpush1.xpose.msra.mxu0 0.0
    %500 = vmatprep.subr.mxu0 0.0
    %501 = vmatpush1.xpose.msra.mxu0 0.0
    %502 = vmatprep.subr.mxu0 0.0
    %503 = vmatpush1.xpose.msra.mxu0 0.0
    %504 = vmatprep.subr.mxu0 0.0
    %505 = vmatpush1.xpose.msra.mxu0 0.0
    %506 = vmatprep.subr.mxu0 0.0
    %507 = vmatpush1.xpose.msra.mxu0 0.0
    %508 = vmatprep.subr.mxu0 0.0
    %509 = vmatpush1.xpose.msra.mxu0 0.0
    %510 = vmatprep.subr.mxu0 0.0
    %511 = vmatpush1.xpose.msra.mxu0 0.0
    %512 = vmatprep.subr.mxu0 0.0
    %513 = vmatpush1.xpose.msra.mxu0 0.0
    %514 = vmatprep.subr.mxu0 0.0
    %515 = vmatpush1.xpose.msra.mxu0 0.0
    %516 = vmatprep.subr.mxu0 0.0
    %517 = vmatpush1.xpose.msra.mxu0 0.0
    %518 = vmatprep.subr.mxu0 0.0
    %519 = vmatpush1.xpose.msra.mxu0 0.0
    %520 = vmatprep.subr.mxu0 0.0
    %521 = vmatpush1.xpose.msra.mxu0 0.0
    %522 = vmatprep.subr.mxu0 0.0
    %523 = vmatpush1.xpose.msra.mxu0 0.0
    %524 = vmatprep.subr.mxu0 0.0
    %525 = vmatpush1.xpose.msra.mxu0 0.0
    %526 = vmatprep.subr.mxu0 0.0
    %527 = vmatpush1.xpose.msra.mxu0 0.0
    %528 = vmatprep.subr.mxu0 0.0
    %529 = vmatpush1.xpose.msra.mxu0 0.0
    %530 = vmatprep.subr.mxu0 0.0
    %531 = vmatpush1.xpose.msra.mxu0 0.0
    %532 = vmatprep.subr.mxu0 0.0
    %533 = vmatpush1.xpose.msra.mxu0 0.0
    %534 = vmatprep.subr.mxu0 0.0
    %535 = vmatpush1.xpose.msra.mxu0 0.0
    %536 = vmatprep.subr.mxu0 0.0
    %537 = vmatpush1.xpose.msra.mxu0 0.0
    %538 = vmatprep.subr.mxu0 0.0
    %539 = vmatpush1.xpose.msra.mxu0 0.0
    %540 = vmatprep.subr.mxu0 0.0
    %541 = vmatpush1.xpose.msra.mxu0 0.0
    %542 = vmatprep.subr.mxu0 0.0
    %543 = vmatpush1.xpose.msra.mxu0 0.0
    %544 = vmatprep.mubr.f32.mxu0 0.0
    %545 = vmatmul.mubr.f32.gmra.mrb[0].mxu0 %v472
    %v546 = vpop.f32.mrb[0].mxu0
    %v547 = vadd.f32 0.0, %v546
    %v548 = vpop.f32.mrb[0].mxu0
    %549 = vmatprep.mubr.f32.mxu0 0.0
    %550 = vmatmul.mubr.f32.gmra.mrb[0].mxu0 %v474
    %v551 = vpop.f32.mrb[0].mxu0
    %v552 = vadd.f32 0.0, %v551
    %v553 = vpop.f32.mrb[0].mxu0
    %554 = vdwg.mxu0
    %v555 = vmul.f32 %v458, 0.25
    %v556 = vmul.f32 %v463, 0.25
    %v557 = vmul.f32 %v547, 0.25
    %v558 = vmul.f32 %v552, 0.25
    %v559 = vadd.f32 %v555, %v374
    %v560 = vadd.f32 %v556, %v375
    %v561 = vadd.f32 %v557, %v374
    %v562 = vadd.f32 %v558, %v375
    %v563 = vsel %vm382, %v559, -inf
    %564 = vmax.xlane.f32.xlu0 %v563
    %v565 = vpop.xlane.xlu0 %564
    %v566 = vsel %vm382, %v560, -inf
    %567 = vmax.xlane.f32.xlu0 %v566
    %v568 = vpop.xlane.xlu0 %567
    %v569 = vsel %vm382, %v561, -inf
    %570 = vmax.xlane.f32.xlu0 %v569
    %v571 = vpop.xlane.xlu0 %570
    %v572 = vsel %vm382, %v562, -inf
    %573 = vmax.xlane.f32.xlu0 %v572
    %v574 = vpop.xlane.xlu0 %573
    %v575 = vsub.f32 %v559, %v565
    %v576 = vsub.f32 %v560, %v568
    %v577 = vsub.f32 %v561, %v571
    %v578 = vsub.f32 %v562, %v574
    %v579 = vmul.f32 %v575, 1.442695
    %v580 = vpow.pop %v579
    %v581 = vmul.f32 %v576, 1.442695
    %v582 = vpow.pop %v581
    %v583 = vmul.f32 %v577, 1.442695
    %v584 = vpow.pop %v583
    %v585 = vmul.f32 %v578, 1.442695
    %v586 = vpow.pop %v585
    %v587 = vsel %vm382, %v580, 0.0
    %588 = vadd.xlane.f32.xlu0 %v587
    %v589 = vpop.xlane.xlu0 %588
    %v590 = vsel %vm382, %v582, 0.0
    %591 = vadd.xlane.f32.xlu0 %v590
    %v592 = vpop.xlane.xlu0 %591
    %v593 = vsel %vm382, %v584, 0.0
    %594 = vadd.xlane.f32.xlu0 %v593
    %v595 = vpop.xlane.xlu0 %594
    %v596 = vsel %vm382, %v586, 0.0
    %597 = vadd.xlane.f32.xlu0 %v596
    %v598 = vpop.xlane.xlu0 %597
    %v599 = vrcp.pop %v589
    %v600 = vrcp.pop %v592
    %v601 = vrcp.pop %v595
    %v602 = vrcp.pop %v598
    %v603 = vmul.f32 %v580, %v599
    %v604 = vmul.f32 %v582, %v600
    %v605 = vmul.f32 %v584, %v601
    %v606 = vmul.f32 %v586, %v602
    %607 = vrot.lane.b32.xlu0 %v356, 64
    %v608 = vpop.permute.xlu0 %607
    %609 = vrot.lane.b32.xlu0 %v361, 64
    %v610 = vpop.permute.xlu0 %609
    %v614 = vsel %vm382, %v603, 0
    %v617 = vsel %vm382, %v604, 0
    %619 = vmatprep.subr.mxu0 0.0
    %620 = vmatpush1.msra.mxu0 %v608
    %621 = vmatprep.subr.mxu0 0.0
    %622 = vmatpush1.msra.mxu0 %v610
    %623 = vmatprep.subr.mxu0 0.0
    %624 = vmatpush1.msra.mxu0 0.0
    %625 = vmatprep.subr.mxu0 0.0
    %626 = vmatpush1.msra.mxu0 0.0
    %627 = vmatprep.subr.mxu0 0.0
    %628 = vmatpush1.msra.mxu0 0.0
    %629 = vmatprep.subr.mxu0 0.0
    %630 = vmatpush1.msra.mxu0 0.0
    %631 = vmatprep.subr.mxu0 0.0
    %632 = vmatpush1.msra.mxu0 0.0
    %633 = vmatprep.subr.mxu0 0.0
    %634 = vmatpush1.msra.mxu0 0.0
    %635 = vmatprep.subr.mxu0 0.0
    %636 = vmatpush1.msra.mxu0 0.0
    %637 = vmatprep.subr.mxu0 0.0
    %638 = vmatpush1.msra.mxu0 0.0
    %639 = vmatprep.subr.mxu0 0.0
    %640 = vmatpush1.msra.mxu0 0.0
    %641 = vmatprep.subr.mxu0 0.0
    %642 = vmatpush1.msra.mxu0 0.0
    %643 = vmatprep.subr.mxu0 0.0
    %644 = vmatpush1.msra.mxu0 0.0
    %645 = vmatprep.subr.mxu0 0.0
    %646 = vmatpush1.msra.mxu0 0.0
    %647 = vmatprep.subr.mxu0 0.0
    %648 = vmatpush1.msra.mxu0 0.0
    %649 = vmatprep.subr.mxu0 0.0
    %650 = vmatpush1.msra.mxu0 0.0
    %651 = vmatprep.subr.mxu0 0.0
    %652 = vmatpush1.msra.mxu0 0.0
    %653 = vmatprep.subr.mxu0 0.0
    %654 = vmatpush1.msra.mxu0 0.0
    %655 = vmatprep.subr.mxu0 0.0
    %656 = vmatpush1.msra.mxu0 0.0
    %657 = vmatprep.subr.mxu0 0.0
    %658 = vmatpush1.msra.mxu0 0.0
    %659 = vmatprep.subr.mxu0 0.0
    %660 = vmatpush1.msra.mxu0 0.0
    %661 = vmatprep.subr.mxu0 0.0
    %662 = vmatpush1.msra.mxu0 0.0
    %663 = vmatprep.subr.mxu0 0.0
    %664 = vmatpush1.msra.mxu0 0.0
    %665 = vmatprep.subr.mxu0 0.0
    %666 = vmatpush1.msra.mxu0 0.0
    %667 = vmatprep.subr.mxu0 0.0
    %668 = vmatpush1.msra.mxu0 0.0
    %669 = vmatprep.subr.mxu0 0.0
    %670 = vmatpush1.msra.mxu0 0.0
    %671 = vmatprep.subr.mxu0 0.0
    %672 = vmatpush1.msra.mxu0 0.0
    %673 = vmatprep.subr.mxu0 0.0
    %674 = vmatpush1.msra.mxu0 0.0
    %675 = vmatprep.subr.mxu0 0.0
    %676 = vmatpush1.msra.mxu0 0.0
    %677 = vmatprep.subr.mxu0 0.0
    %678 = vmatpush1.msra.mxu0 0.0
    %679 = vmatprep.subr.mxu0 0.0
    %680 = vmatpush1.msra.mxu0 0.0
    %681 = vmatprep.subr.mxu0 0.0
    %682 = vmatpush1.msra.mxu0 0.0
    %683 = vmatprep.mubr.f32.mxu0 0.0
    %684 = vmatmul.mubr.f32.gmra.mrb[0].mxu0 %v614
    %v685 = vpop.f32.mrb[0].mxu0
    %v686 = vadd.f32 0.0, %v685
    %v687 = vpop.f32.mrb[0].mxu0
    %688 = vmatprep.mubr.f32.mxu0 0.0
    %689 = vmatmul.mubr.f32.gmra.mrb[0].mxu0 %v617
    %v690 = vpop.f32.mrb[0].mxu0
    %v691 = vadd.f32 0.0, %v690
    %v692 = vpop.f32.mrb[0].mxu0
    %693 = vdwg.mxu0
    %694 = vrot.lane.b32.xlu0 %v366, 64
    %v695 = vpop.permute.xlu0 %694
    %696 = vrot.lane.b32.xlu0 %v371, 64
    %v697 = vpop.permute.xlu0 %696
    %v701 = vsel %vm382, %v605, 0
    %v704 = vsel %vm382, %v606, 0
    %706 = vmatprep.subr.mxu0 0.0
    %707 = vmatpush1.msra.mxu0 %v695
    %708 = vmatprep.subr.mxu0 0.0
    %709 = vmatpush1.msra.mxu0 %v697
    %710 = vmatprep.subr.mxu0 0.0
    %711 = vmatpush1.msra.mxu0 0.0
    %712 = vmatprep.subr.mxu0 0.0
    %713 = vmatpush1.msra.mxu0 0.0
    %714 = vmatprep.subr.mxu0 0.0
    %715 = vmatpush1.msra.mxu0 0.0
    %716 = vmatprep.subr.mxu0 0.0
    %717 = vmatpush1.msra.mxu0 0.0
    %718 = vmatprep.subr.mxu0 0.0
    %719 = vmatpush1.msra.mxu0 0.0
    %720 = vmatprep.subr.mxu0 0.0
    %721 = vmatpush1.msra.mxu0 0.0
    %722 = vmatprep.subr.mxu0 0.0
    %723 = vmatpush1.msra.mxu0 0.0
    %724 = vmatprep.subr.mxu0 0.0
    %725 = vmatpush1.msra.mxu0 0.0
    %726 = vmatprep.subr.mxu0 0.0
    %727 = vmatpush1.msra.mxu0 0.0
    %728 = vmatprep.subr.mxu0 0.0
    %729 = vmatpush1.msra.mxu0 0.0
    %730 = vmatprep.subr.mxu0 0.0
    %731 = vmatpush1.msra.mxu0 0.0
    %732 = vmatprep.subr.mxu0 0.0
    %733 = vmatpush1.msra.mxu0 0.0
    %734 = vmatprep.subr.mxu0 0.0
    %735 = vmatpush1.msra.mxu0 0.0
    %736 = vmatprep.subr.mxu0 0.0
    %737 = vmatpush1.msra.mxu0 0.0
    %738 = vmatprep.subr.mxu0 0.0
    %739 = vmatpush1.msra.mxu0 0.0
    %740 = vmatprep.subr.mxu0 0.0
    %741 = vmatpush1.msra.mxu0 0.0
    %742 = vmatprep.subr.mxu0 0.0
    %743 = vmatpush1.msra.mxu0 0.0
    %744 = vmatprep.subr.mxu0 0.0
    %745 = vmatpush1.msra.mxu0 0.0
    %746 = vmatprep.subr.mxu0 0.0
    %747 = vmatpush1.msra.mxu0 0.0
    %748 = vmatprep.subr.mxu0 0.0
    %749 = vmatpush1.msra.mxu0 0.0
    %750 = vmatprep.subr.mxu0 0.0
    %751 = vmatpush1.msra.mxu0 0.0
    %752 = vmatprep.subr.mxu0 0.0
    %753 = vmatpush1.msra.mxu0 0.0
    %754 = vmatprep.subr.mxu0 0.0
    %755 = vmatpush1.msra.mxu0 0.0
    %756 = vmatprep.subr.mxu0 0.0
    %757 = vmatpush1.msra.mxu0 0.0
    %758 = vmatprep.subr.mxu0 0.0
    %759 = vmatpush1.msra.mxu0 0.0
    %760 = vmatprep.subr.mxu0 0.0
    %761 = vmatpush1.msra.mxu0 0.0
    %762 = vmatprep.subr.mxu0 0.0
    %763 = vmatpush1.msra.mxu0 0.0
    %764 = vmatprep.subr.mxu0 0.0
    %765 = vmatpush1.msra.mxu0 0.0
    %766 = vmatprep.subr.mxu0 0.0
    %767 = vmatpush1.msra.mxu0 0.0
    %768 = vmatprep.subr.mxu0 0.0
    %769 = vmatpush1.msra.mxu0 0.0
    %770 = vmatprep.mubr.f32.mxu0 0.0
    %771 = vmatmul.mubr.f32.gmra.mrb[0].mxu0 %v701
    %v772 = vpop.f32.mrb[0].mxu0
    %v773 = vadd.f32 0.0, %v772
    %v774 = vpop.f32.mrb[0].mxu0
    %775 = vmatprep.mubr.f32.mxu0 0.0
    %776 = vmatmul.mubr.f32.gmra.mrb[0].mxu0 %v704
    %v777 = vpop.f32.mrb[0].mxu0
    %v778 = vadd.f32 0.0, %v777
    %v779 = vpop.f32.mrb[0].mxu0
    %780 = vdwg.mxu0
    %v781 = vld [vmem:[%s1 + $0x150] sm:$0xff]
    %v782 = vld [vmem:[%s1 + $0x158] sm:$0xff]
    %783 = vrot.lane.b32.xlu0 %v356, 112
    %v784 = vpop.permute.xlu0 %783
    %785 = vrot.lane.b32.xlu0 %v361, 112
    %v786 = vpop.permute.xlu0 %785
    %787 = vrot.lane.b32.xlu0 %v356, 80
    %v788 = vpop.permute.xlu0 %787
    %789 = vrot.lane.b32.xlu0 %v361, 80
    %v790 = vpop.permute.xlu0 %789
    %v791 = vsel %vm382, %v784, 0
    %v793 = vsel %vm382, %v786, 0
    %v795 = vsel %vm382, %v788, 0
    %v797 = vsel %vm382, %v790, 0
    %799 = vmatprep.subr.mxu0 0.0
    %800 = vmatpush1.xpose.msra.mxu0 %v795
    %801 = vmatprep.subr.mxu0 0.0
    %802 = vmatpush1.xpose.msra.mxu0 %v797
    %803 = vmatprep.subr.mxu0 0.0
    %804 = vmatpush1.xpose.msra.mxu0 0.0
    %805 = vmatprep.subr.mxu0 0.0
    %806 = vmatpush1.xpose.msra.mxu0 0.0
    %807 = vmatprep.subr.mxu0 0.0
    %808 = vmatpush1.xpose.msra.mxu0 0.0
    %809 = vmatprep.subr.mxu0 0.0
    %810 = vmatpush1.xpose.msra.mxu0 0.0
    %811 = vmatprep.subr.mxu0 0.0
    %812 = vmatpush1.xpose.msra.mxu0 0.0
    %813 = vmatprep.subr.mxu0 0.0
    %814 = vmatpush1.xpose.msra.mxu0 0.0
    %815 = vmatprep.subr.mxu0 0.0
    %816 = vmatpush1.xpose.msra.mxu0 0.0
    %817 = vmatprep.subr.mxu0 0.0
    %818 = vmatpush1.xpose.msra.mxu0 0.0
    %819 = vmatprep.subr.mxu0 0.0
    %820 = vmatpush1.xpose.msra.mxu0 0.0
    %821 = vmatprep.subr.mxu0 0.0
    %822 = vmatpush1.xpose.msra.mxu0 0.0
    %823 = vmatprep.subr.mxu0 0.0
    %824 = vmatpush1.xpose.msra.mxu0 0.0
    %825 = vmatprep.subr.mxu0 0.0
    %826 = vmatpush1.xpose.msra.mxu0 0.0
    %827 = vmatprep.subr.mxu0 0.0
    %828 = vmatpush1.xpose.msra.mxu0 0.0
    %829 = vmatprep.subr.mxu0 0.0
    %830 = vmatpush1.xpose.msra.mxu0 0.0
    %831 = vmatprep.subr.mxu0 0.0
    %832 = vmatpush1.xpose.msra.mxu0 0.0
    %833 = vmatprep.subr.mxu0 0.0
    %834 = vmatpush1.xpose.msra.mxu0 0.0
    %835 = vmatprep.subr.mxu0 0.0
    %836 = vmatpush1.xpose.msra.mxu0 0.0
    %837 = vmatprep.subr.mxu0 0.0
    %838 = vmatpush1.xpose.msra.mxu0 0.0
    %839 = vmatprep.subr.mxu0 0.0
    %840 = vmatpush1.xpose.msra.mxu0 0.0
    %841 = vmatprep.subr.mxu0 0.0
    %842 = vmatpush1.xpose.msra.mxu0 0.0
    %843 = vmatprep.subr.mxu0 0.0
    %844 = vmatpush1.xpose.msra.mxu0 0.0
    %845 = vmatprep.subr.mxu0 0.0
    %846 = vmatpush1.xpose.msra.mxu0 0.0
    %847 = vmatprep.subr.mxu0 0.0
    %848 = vmatpush1.xpose.msra.mxu0 0.0
    %849 = vmatprep.subr.mxu0 0.0
    %850 = vmatpush1.xpose.msra.mxu0 0.0
    %851 = vmatprep.subr.mxu0 0.0
    %852 = vmatpush1.xpose.msra.mxu0 0.0
    %853 = vmatprep.subr.mxu0 0.0
    %854 = vmatpush1.xpose.msra.mxu0 0.0
    %855 = vmatprep.subr.mxu0 0.0
    %856 = vmatpush1.xpose.msra.mxu0 0.0
    %857 = vmatprep.subr.mxu0 0.0
    %858 = vmatpush1.xpose.msra.mxu0 0.0
    %859 = vmatprep.subr.mxu0 0.0
    %860 = vmatpush1.xpose.msra.mxu0 0.0
    %861 = vmatprep.subr.mxu0 0.0
    %862 = vmatpush1.xpose.msra.mxu0 0.0
    %863 = vmatprep.mubr.f32.mxu0 0.0
    %864 = vmatmul.mubr.f32.gmra.mrb[0].mxu0 %v791
    %v865 = vpop.f32.mrb[0].mxu0
    %v866 = vadd.f32 0.0, %v865
    %v867 = vpop.f32.mrb[0].mxu0
    %868 = vmatprep.mubr.f32.mxu0 0.0
    %869 = vmatmul.mubr.f32.gmra.mrb[0].mxu0 %v793
    %v870 = vpop.f32.mrb[0].mxu0
    %v871 = vadd.f32 0.0, %v870
    %v872 = vpop.f32.mrb[0].mxu0
    %873 = vdwg.mxu0
    %874 = vrot.lane.b32.xlu0 %v366, 112
    %v875 = vpop.permute.xlu0 %874
    %876 = vrot.lane.b32.xlu0 %v371, 112
    %v877 = vpop.permute.xlu0 %876
    %878 = vrot.lane.b32.xlu0 %v366, 80
    %v879 = vpop.permute.xlu0 %878
    %880 = vrot.lane.b32.xlu0 %v371, 80
    %v881 = vpop.permute.xlu0 %880
    %v882 = vsel %vm382, %v875, 0
    %v884 = vsel %vm382, %v877, 0
    %v886 = vsel %vm382, %v879, 0
    %v888 = vsel %vm382, %v881, 0
    %890 = vmatprep.subr.mxu0 0.0
    %891 = vmatpush1.xpose.msra.mxu0 %v886
    %892 = vmatprep.subr.mxu0 0.0
    %893 = vmatpush1.xpose.msra.mxu0 %v888
    %894 = vmatprep.subr.mxu0 0.0
    %895 = vmatpush1.xpose.msra.mxu0 0.0
    %896 = vmatprep.subr.mxu0 0.0
    %897 = vmatpush1.xpose.msra.mxu0 0.0
    %898 = vmatprep.subr.mxu0 0.0
    %899 = vmatpush1.xpose.msra.mxu0 0.0
    %900 = vmatprep.subr.mxu0 0.0
    %901 = vmatpush1.xpose.msra.mxu0 0.0
    %902 = vmatprep.subr.mxu0 0.0
    %903 = vmatpush1.xpose.msra.mxu0 0.0
    %904 = vmatprep.subr.mxu0 0.0
    %905 = vmatpush1.xpose.msra.mxu0 0.0
    %906 = vmatprep.subr.mxu0 0.0
    %907 = vmatpush1.xpose.msra.mxu0 0.0
    %908 = vmatprep.subr.mxu0 0.0
    %909 = vmatpush1.xpose.msra.mxu0 0.0
    %910 = vmatprep.subr.mxu0 0.0
    %911 = vmatpush1.xpose.msra.mxu0 0.0
    %912 = vmatprep.subr.mxu0 0.0
    %913 = vmatpush1.xpose.msra.mxu0 0.0
    %914 = vmatprep.subr.mxu0 0.0
    %915 = vmatpush1.xpose.msra.mxu0 0.0
    %916 = vmatprep.subr.mxu0 0.0
    %917 = vmatpush1.xpose.msra.mxu0 0.0
    %918 = vmatprep.subr.mxu0 0.0
    %919 = vmatpush1.xpose.msra.mxu0 0.0
    %920 = vmatprep.subr.mxu0 0.0
    %921 = vmatpush1.xpose.msra.mxu0 0.0
    %922 = vmatprep.subr.mxu0 0.0
    %923 = vmatpush1.xpose.msra.mxu0 0.0
    %924 = vmatprep.subr.mxu0 0.0
    %925 = vmatpush1.xpose.msra.mxu0 0.0
    %926 = vmatprep.subr.mxu0 0.0
    %927 = vmatpush1.xpose.msra.mxu0 0.0
    %928 = vmatprep.subr.mxu0 0.0
    %929 = vmatpush1.xpose.msra.mxu0 0.0
    %930 = vmatprep.subr.mxu0 0.0
    %931 = vmatpush1.xpose.msra.mxu0 0.0
    %932 = vmatprep.subr.mxu0 0.0
    %933 = vmatpush1.xpose.msra.mxu0 0.0
    %934 = vmatprep.subr.mxu0 0.0
    %935 = vmatpush1.xpose.msra.mxu0 0.0
    %936 = vmatprep.subr.mxu0 0.0
    %937 = vmatpush1.xpose.msra.mxu0 0.0
    %938 = vmatprep.subr.mxu0 0.0
    %939 = vmatpush1.xpose.msra.mxu0 0.0
    %940 = vmatprep.subr.mxu0 0.0
    %941 = vmatpush1.xpose.msra.mxu0 0.0
    %942 = vmatprep.subr.mxu0 0.0
    %943 = vmatpush1.xpose.msra.mxu0 0.0
    %944 = vmatprep.subr.mxu0 0.0
    %945 = vmatpush1.xpose.msra.mxu0 0.0
    %946 = vmatprep.subr.mxu0 0.0
    %947 = vmatpush1.xpose.msra.mxu0 0.0
    %948 = vmatprep.subr.mxu0 0.0
    %949 = vmatpush1.xpose.msra.mxu0 0.0
    %950 = vmatprep.subr.mxu0 0.0
    %951 = vmatpush1.xpose.msra.mxu0 0.0
    %952 = vmatprep.subr.mxu0 0.0
    %953 = vmatpush1.xpose.msra.mxu0 0.0
    %954 = vmatprep.mubr.f32.mxu0 0.0
    %955 = vmatmul.mubr.f32.gmra.mrb[0].mxu0 %v882
    %v956 = vpop.f32.mrb[0].mxu0
    %v957 = vadd.f32 0.0, %v956
    %v958 = vpop.f32.mrb[0].mxu0
    %959 = vmatprep.mubr.f32.mxu0 0.0
    %960 = vmatmul.mubr.f32.gmra.mrb[0].mxu0 %v884
    %v961 = vpop.f32.mrb[0].mxu0
    %v962 = vadd.f32 0.0, %v961
    %v963 = vpop.f32.mrb[0].mxu0
    %964 = vdwg.mxu0
    %v965 = vmul.f32 %v866, 0.25
    %v966 = vmul.f32 %v871, 0.25
    %v967 = vmul.f32 %v957, 0.25
    %v968 = vmul.f32 %v962, 0.25
    %v969 = vadd.f32 %v965, %v781
    %v970 = vadd.f32 %v966, %v782
    %v971 = vadd.f32 %v967, %v781
    %v972 = vadd.f32 %v968, %v782
    %v973 = vsel %vm382, %v969, -inf
    %974 = vmax.xlane.f32.xlu0 %v973
    %v975 = vpop.xlane.xlu0 %974
    %v976 = vsel %vm382, %v970, -inf
    %977 = vmax.xlane.f32.xlu0 %v976
    %v978 = vpop.xlane.xlu0 %977
    %v979 = vsel %vm382, %v971, -inf
    %980 = vmax.xlane.f32.xlu0 %v979
    %v981 = vpop.xlane.xlu0 %980
    %v982 = vsel %vm382, %v972, -inf
    %983 = vmax.xlane.f32.xlu0 %v982
    %v984 = vpop.xlane.xlu0 %983
    %v985 = vsub.f32 %v969, %v975
    %v986 = vsub.f32 %v970, %v978
    %v987 = vsub.f32 %v971, %v981
    %v988 = vsub.f32 %v972, %v984
    %v989 = vmul.f32 %v985, 1.442695
    %v990 = vpow.pop %v989
    %v991 = vmul.f32 %v986, 1.442695
    %v992 = vpow.pop %v991
    %v993 = vmul.f32 %v987, 1.442695
    %v994 = vpow.pop %v993
    %v995 = vmul.f32 %v988, 1.442695
    %v996 = vpow.pop %v995
    %v997 = vsel %vm382, %v990, 0.0
    %998 = vadd.xlane.f32.xlu0 %v997
    %v999 = vpop.xlane.xlu0 %998
    %v1000 = vsel %vm382, %v992, 0.0
    %1001 = vadd.xlane.f32.xlu0 %v1000
    %v1002 = vpop.xlane.xlu0 %1001
    %v1003 = vsel %vm382, %v994, 0.0
    %1004 = vadd.xlane.f32.xlu0 %v1003
    %v1005 = vpop.xlane.xlu0 %1004
    %v1006 = vsel %vm382, %v996, 0.0
    %1007 = vadd.xlane.f32.xlu0 %v1006
    %v1008 = vpop.xlane.xlu0 %1007
    %v1009 = vrcp.pop %v999
    %v1010 = vrcp.pop %v1002
    %v1011 = vrcp.pop %v1005
    %v1012 = vrcp.pop %v1008
    %v1013 = vmul.f32 %v990, %v1009
    %v1014 = vmul.f32 %v992, %v1010
    %v1015 = vmul.f32 %v994, %v1011
    %v1016 = vmul.f32 %v996, %v1012
    %1017 = vrot.lane.b32.xlu0 %v356, 48
    %v1018 = vpop.permute.xlu0 %1017
    %1019 = vrot.lane.b32.xlu0 %v361, 48
    %v1020 = vpop.permute.xlu0 %1019
    %v1024 = vsel %vm382, %v1013, 0
    %v1027 = vsel %vm382, %v1014, 0
    %1029 = vmatprep.subr.mxu0 0.0
    %1030 = vmatpush1.msra.mxu0 %v1018
    %1031 = vmatprep.subr.mxu0 0.0
    %1032 = vmatpush1.msra.mxu0 %v1020
    %1033 = vmatprep.subr.mxu0 0.0
    %1034 = vmatpush1.msra.mxu0 0.0
    %1035 = vmatprep.subr.mxu0 0.0
    %1036 = vmatpush1.msra.mxu0 0.0
    %1037 = vmatprep.subr.mxu0 0.0
    %1038 = vmatpush1.msra.mxu0 0.0
    %1039 = vmatprep.subr.mxu0 0.0
    %1040 = vmatpush1.msra.mxu0 0.0
    %1041 = vmatprep.subr.mxu0 0.0
    %1042 = vmatpush1.msra.mxu0 0.0
    %1043 = vmatprep.subr.mxu0 0.0
    %1044 = vmatpush1.msra.mxu0 0.0
    %1045 = vmatprep.subr.mxu0 0.0
    %1046 = vmatpush1.msra.mxu0 0.0
    %1047 = vmatprep.subr.mxu0 0.0
    %1048 = vmatpush1.msra.mxu0 0.0
    %1049 = vmatprep.subr.mxu0 0.0
    %1050 = vmatpush1.msra.mxu0 0.0
    %1051 = vmatprep.subr.mxu0 0.0
    %1052 = vmatpush1.msra.mxu0 0.0
    %1053 = vmatprep.subr.mxu0 0.0
    %1054 = vmatpush1.msra.mxu0 0.0
    %1055 = vmatprep.subr.mxu0 0.0
    %1056 = vmatpush1.msra.mxu0 0.0
    %1057 = vmatprep.subr.mxu0 0.0
    %1058 = vmatpush1.msra.mxu0 0.0
    %1059 = vmatprep.subr.mxu0 0.0
    %1060 = vmatpush1.msra.mxu0 0.0
    %1061 = vmatprep.subr.mxu0 0.0
    %1062 = vmatpush1.msra.mxu0 0.0
    %1063 = vmatprep.subr.mxu0 0.0
    %1064 = vmatpush1.msra.mxu0 0.0
    %1065 = vmatprep.subr.mxu0 0.0
    %1066 = vmatpush1.msra.mxu0 0.0
    %1067 = vmatprep.subr.mxu0 0.0
    %1068 = vmatpush1.msra.mxu0 0.0
    %1069 = vmatprep.subr.mxu0 0.0
    %1070 = vmatpush1.msra.mxu0 0.0
    %1071 = vmatprep.subr.mxu0 0.0
    %1072 = vmatpush1.msra.mxu0 0.0
    %1073 = vmatprep.subr.mxu0 0.0
    %1074 = vmatpush1.msra.mxu0 0.0
    %1075 = vmatprep.subr.mxu0 0.0
    %1076 = vmatpush1.msra.mxu0 0.0
    %1077 = vmatprep.subr.mxu0 0.0
    %1078 = vmatpush1.msra.mxu0 0.0
    %1079 = vmatprep.subr.mxu0 0.0
    %1080 = vmatpush1.msra.mxu0 0.0
    %1081 = vmatprep.subr.mxu0 0.0
    %1082 = vmatpush1.msra.mxu0 0.0
    %1083 = vmatprep.subr.mxu0 0.0
    %1084 = vmatpush1.msra.mxu0 0.0
    %1085 = vmatprep.subr.mxu0 0.0
    %1086 = vmatpush1.msra.mxu0 0.0
    %1087 = vmatprep.subr.mxu0 0.0
    %1088 = vmatpush1.msra.mxu0 0.0
    %1089 = vmatprep.subr.mxu0 0.0
    %1090 = vmatpush1.msra.mxu0 0.0
    %1091 = vmatprep.subr.mxu0 0.0
    %1092 = vmatpush1.msra.mxu0 0.0
    %1093 = vmatprep.mubr.f32.mxu0 0.0
    %1094 = vmatmul.mubr.f32.gmra.mrb[0].mxu0 %v1024
    %v1095 = vpop.f32.mrb[0].mxu0
    %v1096 = vadd.f32 0.0, %v1095
    %v1097 = vpop.f32.mrb[0].mxu0
    %1098 = vmatprep.mubr.f32.mxu0 0.0
    %1099 = vmatmul.mubr.f32.gmra.mrb[0].mxu0 %v1027
    %v1100 = vpop.f32.mrb[0].mxu0
    %v1101 = vadd.f32 0.0, %v1100
    %v1102 = vpop.f32.mrb[0].mxu0
    %1103 = vdwg.mxu0
    %1104 = vrot.lane.b32.xlu0 %v366, 48
    %v1105 = vpop.permute.xlu0 %1104
    %1106 = vrot.lane.b32.xlu0 %v371, 48
    %v1107 = vpop.permute.xlu0 %1106
    %v1111 = vsel %vm382, %v1015, 0
    %v1114 = vsel %vm382, %v1016, 0
    %1116 = vmatprep.subr.mxu0 0.0
    %1117 = vmatpush1.msra.mxu0 %v1105
    %1118 = vmatprep.subr.mxu0 0.0
    %1119 = vmatpush1.msra.mxu0 %v1107
    %1120 = vmatprep.subr.mxu0 0.0
    %1121 = vmatpush1.msra.mxu0 0.0
    %1122 = vmatprep.subr.mxu0 0.0
    %1123 = vmatpush1.msra.mxu0 0.0
    %1124 = vmatprep.subr.mxu0 0.0
    %1125 = vmatpush1.msra.mxu0 0.0
    %1126 = vmatprep.subr.mxu0 0.0
    %1127 = vmatpush1.msra.mxu0 0.0
    %1128 = vmatprep.subr.mxu0 0.0
    %1129 = vmatpush1.msra.mxu0 0.0
    %1130 = vmatprep.subr.mxu0 0.0
    %1131 = vmatpush1.msra.mxu0 0.0
    %1132 = vmatprep.subr.mxu0 0.0
    %1133 = vmatpush1.msra.mxu0 0.0
    %1134 = vmatprep.subr.mxu0 0.0
    %1135 = vmatpush1.msra.mxu0 0.0
    %1136 = vmatprep.subr.mxu0 0.0
    %1137 = vmatpush1.msra.mxu0 0.0
    %1138 = vmatprep.subr.mxu0 0.0
    %1139 = vmatpush1.msra.mxu0 0.0
    %1140 = vmatprep.subr.mxu0 0.0
    %1141 = vmatpush1.msra.mxu0 0.0
    %1142 = vmatprep.subr.mxu0 0.0
    %1143 = vmatpush1.msra.mxu0 0.0
    %1144 = vmatprep.subr.mxu0 0.0
    %1145 = vmatpush1.msra.mxu0 0.0
    %1146 = vmatprep.subr.mxu0 0.0
    %1147 = vmatpush1.msra.mxu0 0.0
    %1148 = vmatprep.subr.mxu0 0.0
    %1149 = vmatpush1.msra.mxu0 0.0
    %1150 = vmatprep.subr.mxu0 0.0
    %1151 = vmatpush1.msra.mxu0 0.0
    %1152 = vmatprep.subr.mxu0 0.0
    %1153 = vmatpush1.msra.mxu0 0.0
    %1154 = vmatprep.subr.mxu0 0.0
    %1155 = vmatpush1.msra.mxu0 0.0
    %1156 = vmatprep.subr.mxu0 0.0
    %1157 = vmatpush1.msra.mxu0 0.0
    %1158 = vmatprep.subr.mxu0 0.0
    %1159 = vmatpush1.msra.mxu0 0.0
    %1160 = vmatprep.subr.mxu0 0.0
    %1161 = vmatpush1.msra.mxu0 0.0
    %1162 = vmatprep.subr.mxu0 0.0
    %1163 = vmatpush1.msra.mxu0 0.0
    %1164 = vmatprep.subr.mxu0 0.0
    %1165 = vmatpush1.msra.mxu0 0.0
    %1166 = vmatprep.subr.mxu0 0.0
    %1167 = vmatpush1.msra.mxu0 0.0
    %1168 = vmatprep.subr.mxu0 0.0
    %1169 = vmatpush1.msra.mxu0 0.0
    %1170 = vmatprep.subr.mxu0 0.0
    %1171 = vmatpush1.msra.mxu0 0.0
    %1172 = vmatprep.subr.mxu0 0.0
    %1173 = vmatpush1.msra.mxu0 0.0
    %1174 = vmatprep.subr.mxu0 0.0
    %1175 = vmatpush1.msra.mxu0 0.0
    %1176 = vmatprep.subr.mxu0 0.0
    %1177 = vmatpush1.msra.mxu0 0.0
    %1178 = vmatprep.subr.mxu0 0.0
    %1179 = vmatpush1.msra.mxu0 0.0
    %1180 = vmatprep.mubr.f32.mxu0 0.0
    %1181 = vmatmul.mubr.f32.gmra.mrb[0].mxu0 %v1111
    %v1182 = vpop.f32.mrb[0].mxu0
    %v1183 = vadd.f32 0.0, %v1182
    %v1184 = vpop.f32.mrb[0].mxu0
    %1185 = vmatprep.mubr.f32.mxu0 0.0
    %1186 = vmatmul.mubr.f32.gmra.mrb[0].mxu0 %v1114
    %v1187 = vpop.f32.mrb[0].mxu0
    %v1188 = vadd.f32 0.0, %v1187
    %v1189 = vpop.f32.mrb[0].mxu0
    %1190 = vdwg.mxu0
    %1195 = vrot.lane.b32.xlu0 %v1096, 16
    %v1196 = vpop.permute.xlu0 %1195
    %1197 = vrot.lane.b32.xlu0 %v1101, 16
    %v1198 = vpop.permute.xlu0 %1197
    %1199 = vrot.lane.b32.xlu0 %v1183, 16
    %v1200 = vpop.permute.xlu0 %1199
    %1201 = vrot.lane.b32.xlu0 %v1188, 16
    %v1202 = vpop.permute.xlu0 %1201
    %v1207 = vsel %vm382, %v686, %v1196
    %v1208 = vsel %vm382, %v691, %v1198
    %v1209 = vsel %vm382, %v773, %v1200
    %v1210 = vsel %vm382, %v778, %v1202
    %v1211 = vld [vmem:[%s1 + $0x60] sm:$0xff]
    %v1212 = vld [vmem:[%s1 + $0x68] sm:$0xff]
    %v1213 = vld [vmem:[%s1 + $0x70] sm:$0xff]
    %v1214 = vld [vmem:[%s1 + $0x78] sm:$0xff]
    %v1215 = vlaneseq
    %v1216 = vshrl.u32 %v1215, 7
    %v1217 = vsub.s32 6, %v1216
    %v1218 = vrot.slane %v15, %v1217
    %v1220 = vsel %vm131, %v1207, 0
    %v1223 = vsel %vm131, %v1208, 0
    %v1226 = vsel %vm131, %v1209, 0
    %v1229 = vsel %vm131, %v1210, 0
    %1231 = vmatprep.subr.mxu0 0.0
    %1232 = vmatpush1.msra.mxu0 %v1211
    %1233 = vmatprep.subr.mxu0 0.0
    %1234 = vmatpush1.msra.mxu0 %v1212
    %1235 = vmatprep.subr.mxu0 0.0
    %1236 = vmatpush1.msra.mxu0 %v1213
    %1237 = vmatprep.subr.mxu0 0.0
    %1238 = vmatpush1.msra.mxu0 %v1214
    %1239 = vmatprep.subr.mxu0 0.0
    %1240 = vmatpush1.msra.mxu0 0.0
    %1241 = vmatprep.subr.mxu0 0.0
    %1242 = vmatpush1.msra.mxu0 0.0
    %1243 = vmatprep.subr.mxu0 0.0
    %1244 = vmatpush1.msra.mxu0 0.0
    %1245 = vmatprep.subr.mxu0 0.0
    %1246 = vmatpush1.msra.mxu0 0.0
    %1247 = vmatprep.subr.mxu0 0.0
    %1248 = vmatpush1.msra.mxu0 0.0
    %1249 = vmatprep.subr.mxu0 0.0
    %1250 = vmatpush1.msra.mxu0 0.0
    %1251 = vmatprep.subr.mxu0 0.0
    %1252 = vmatpush1.msra.mxu0 0.0
    %1253 = vmatprep.subr.mxu0 0.0
    %1254 = vmatpush1.msra.mxu0 0.0
    %1255 = vmatprep.subr.mxu0 0.0
    %1256 = vmatpush1.msra.mxu0 0.0
    %1257 = vmatprep.subr.mxu0 0.0
    %1258 = vmatpush1.msra.mxu0 0.0
    %1259 = vmatprep.subr.mxu0 0.0
    %1260 = vmatpush1.msra.mxu0 0.0
    %1261 = vmatprep.subr.mxu0 0.0
    %1262 = vmatpush1.msra.mxu0 0.0
    %1263 = vmatprep.subr.mxu0 0.0
    %1264 = vmatpush1.msra.mxu0 0.0
    %1265 = vmatprep.subr.mxu0 0.0
    %1266 = vmatpush1.msra.mxu0 0.0
    %1267 = vmatprep.subr.mxu0 0.0
    %1268 = vmatpush1.msra.mxu0 0.0
    %1269 = vmatprep.subr.mxu0 0.0
    %1270 = vmatpush1.msra.mxu0 0.0
    %1271 = vmatprep.subr.mxu0 0.0
    %1272 = vmatpush1.msra.mxu0 0.0
    %1273 = vmatprep.subr.mxu0 0.0
    %1274 = vmatpush1.msra.mxu0 0.0
    %1275 = vmatprep.subr.mxu0 0.0
    %1276 = vmatpush1.msra.mxu0 0.0
    %1277 = vmatprep.subr.mxu0 0.0
    %1278 = vmatpush1.msra.mxu0 0.0
    %1279 = vmatprep.subr.mxu0 0.0
    %1280 = vmatpush1.msra.mxu0 0.0
    %1281 = vmatprep.subr.mxu0 0.0
    %1282 = vmatpush1.msra.mxu0 0.0
    %1283 = vmatprep.subr.mxu0 0.0
    %1284 = vmatpush1.msra.mxu0 0.0
    %1285 = vmatprep.subr.mxu0 0.0
    %1286 = vmatpush1.msra.mxu0 0.0
    %1287 = vmatprep.subr.mxu0 0.0
    %1288 = vmatpush1.msra.mxu0 0.0
    %1289 = vmatprep.subr.mxu0 0.0
    %1290 = vmatpush1.msra.mxu0 0.0
    %1291 = vmatprep.subr.mxu0 0.0
    %1292 = vmatpush1.msra.mxu0 0.0
    %1293 = vmatprep.subr.mxu0 0.0
    %1294 = vmatpush1.msra.mxu0 0.0
    %1295 = vmatprep.mubr.f32.mxu0 0.0
    %1296 = vmatmul.mubr.f32.gmra.mrb[0].mxu0 %v1220
    %v1297 = vpop.f32.mrb[0].mxu0
    %v1298 = vadd.f32 %v1218, %v1297
    %v1299 = vpop.f32.mrb[0].mxu0
    %1300 = vmatprep.mubr.f32.mxu0 0.0
    %1301 = vmatmul.mubr.f32.gmra.mrb[0].mxu0 %v1223
    %v1302 = vpop.f32.mrb[0].mxu0
    %v1303 = vadd.f32 %v1218, %v1302
    %v1304 = vpop.f32.mrb[0].mxu0
    %1305 = vmatprep.mubr.f32.mxu0 0.0
    %1306 = vmatmul.mubr.f32.gmra.mrb[0].mxu0 %v1226
    %v1307 = vpop.f32.mrb[0].mxu0
    %v1308 = vadd.f32 %v1218, %v1307
    %v1309 = vpop.f32.mrb[0].mxu0
    %1310 = vmatprep.mubr.f32.mxu0 0.0
    %1311 = vmatmul.mubr.f32.gmra.mrb[0].mxu0 %v1229
    %v1312 = vpop.f32.mrb[0].mxu0
    %v1313 = vadd.f32 %v1218, %v1312
    %v1314 = vpop.f32.mrb[0].mxu0
    %1315 = vdwg.mxu0
    %v1316 = vadd.f32 %v197, %v1298
    %v1317 = vadd.f32 %v198, %v1303
    %v1318 = vadd.f32 %v199, %v1308
    %v1319 = vadd.f32 %v200, %v1313
    %v1320 = vsel %vm131, %v1316, 0.0
    %1321 = vadd.xlane.f32.xlu0 %v1320
    %v1322 = vpop.xlane.xlu0 %1321
    %v1323 = vsel %vm131, %v1317, 0.0
    %1324 = vadd.xlane.f32.xlu0 %v1323
    %v1325 = vpop.xlane.xlu0 %1324
    %v1326 = vsel %vm131, %v1318, 0.0
    %1327 = vadd.xlane.f32.xlu0 %v1326
    %v1328 = vpop.xlane.xlu0 %1327
    %v1329 = vsel %vm131, %v1319, 0.0
    %1330 = vadd.xlane.f32.xlu0 %v1329
    %v1331 = vpop.xlane.xlu0 %1330
    %v1332 = vmul.f32 %v1322, %v144
    %v1333 = vmul.f32 %v1325, %v144
    %v1334 = vmul.f32 %v1328, %v144
    %v1335 = vmul.f32 %v1331, %v144
    %v1336 = vsub.f32 %v1316, %v1332
    %v1337 = vsub.f32 %v1317, %v1333
    %v1338 = vsub.f32 %v1318, %v1334
    %v1339 = vsub.f32 %v1319, %v1335
    %v1340 = vmul.f32 %v1336, %v1336
    %v1341 = vmul.f32 %v1337, %v1337
    %v1342 = vmul.f32 %v1338, %v1338
    %v1343 = vmul.f32 %v1339, %v1339
    %v1344 = vsel %vm131, %v1340, 0.0
    %1345 = vadd.xlane.f32.xlu0 %v1344
    %v1346 = vpop.xlane.xlu0 %1345
    %v1347 = vsel %vm131, %v1341, 0.0
    %1348 = vadd.xlane.f32.xlu0 %v1347
    %v1349 = vpop.xlane.xlu0 %1348
    %v1350 = vsel %vm131, %v1342, 0.0
    %1351 = vadd.xlane.f32.xlu0 %v1350
    %v1352 = vpop.xlane.xlu0 %1351
    %v1353 = vsel %vm131, %v1343, 0.0
    %1354 = vadd.xlane.f32.xlu0 %v1353
    %v1355 = vpop.xlane.xlu0 %1354
    %v1356 = vmul.f32 %v1346, %v144
    %v1357 = vmul.f32 %v1349, %v144
    %v1358 = vmul.f32 %v1352, %v144
    %v1359 = vmul.f32 %v1355, %v144
    %v1360 = vadd.f32 %v1356, 1e-05
    %v1361 = vadd.f32 %v1357, 1e-05
    %v1362 = vadd.f32 %v1358, 1e-05
    %v1363 = vadd.f32 %v1359, 1e-05
    %v1364 = vrsqrt.pop %v1360
    %v1365 = vrsqrt.pop %v1361
    %v1366 = vrsqrt.pop %v1362
    %v1367 = vrsqrt.pop %v1363
    %v1368 = vmul.f32 %v1336, %v1364
    %v1369 = vmul.f32 %v1337, %v1365
    %v1370 = vmul.f32 %v1338, %v1366
    %v1371 = vmul.f32 %v1339, %v1367
    %v1372 = vlaneseq
    %v1373 = vshrl.u32 %v1372, 7
    %v1374 = vsub.s32 7, %v1373
    %v1375 = vrot.slane %v15, %v1374
    %v1376 = vmul.f32 %v1368, %v1375
    %v1377 = vmul.f32 %v1369, %v1375
    %v1378 = vmul.f32 %v1370, %v1375
    %v1379 = vmul.f32 %v1371, %v1375
    %v1380 = vlaneseq
    %v1381 = vshrl.u32 %v1380, 7
    %v1382 = vsub.s32 0, %v1381
    %v1383 = vrot.slane %v16, %v1382
    %v1384 = vadd.f32 %v1376, %v1383
    %v1385 = vadd.f32 %v1377, %v1383
    %v1386 = vadd.f32 %v1378, %v1383
    %v1387 = vadd.f32 %v1379, %v1383
    %v1388 = vld [vmem:[%s1 + $0x80] sm:$0xff]
    %v1389 = vld [vmem:[%s1 + $0x88] sm:$0xff]
    %v1390 = vld [vmem:[%s1 + $0x90] sm:$0xff]
    %v1391 = vld [vmem:[%s1 + $0x98] sm:$0xff]
    %v1392 = vld [vmem:[%s1 + $0xa0] sm:$0xff]
    %v1393 = vld [vmem:[%s1 + $0xa8] sm:$0xff]
    %v1394 = vld [vmem:[%s1 + $0xb0] sm:$0xff]
    %v1395 = vld [vmem:[%s1 + $0xb8] sm:$0xff]
    %v1396 = vld [vmem:[%s1 + $0xc0] sm:$0xff]
    %v1397 = vld [vmem:[%s1 + $0xc8] sm:$0xff]
    %v1398 = vld [vmem:[%s1 + $0xd0] sm:$0xff]
    %v1399 = vld [vmem:[%s1 + $0xd8] sm:$0xff]
    %v1400 = vld [vmem:[%s1 + $0xe0] sm:$0xff]
    %v1401 = vld [vmem:[%s1 + $0xe8] sm:$0xff]
    %v1402 = vld [vmem:[%s1 + $0xf0] sm:$0xff]
    %v1403 = vld [vmem:[%s1 + $0xf8] sm:$0xff]
    %v1404 = vld [vmem:[%s1 + $0x100] sm:$0xff]
    %v1405 = vld [vmem:[%s1 + $0x108] sm:$0xff]
    %v1406 = vld [vmem:[%s1 + $0x110] sm:$0xff]
    %v1407 = vld [vmem:[%s1 + $0x118] sm:$0xff]
    %v1408 = vlaneseq
    %v1409 = vshrl.u32 %v1408, 7
    %v1410 = vsub.s32 1, %v1409
    %v1411 = vrot.slane %v16, %v1410
    %v1413 = vsel %vm131, %v1384, 0
    %v1416 = vsel %vm131, %v1385, 0
    %v1419 = vsel %vm131, %v1386, 0
    %v1422 = vsel %vm131, %v1387, 0
    %1424 = vmatprep.subr.mxu0 0.0
    %1425 = vmatpush1.msra.mxu0 %v1388
    %1426 = vmatprep.subr.mxu0 0.0
    %1427 = vmatpush1.msra.mxu0 %v1389
    %1428 = vmatprep.subr.mxu0 0.0
    %1429 = vmatpush1.msra.mxu0 %v1390
    %1430 = vmatprep.subr.mxu0 0.0
    %1431 = vmatpush1.msra.mxu0 %v1391
    %1432 = vmatprep.subr.mxu0 0.0
    %1433 = vmatpush1.msra.mxu0 0.0
    %1434 = vmatprep.subr.mxu0 0.0
    %1435 = vmatpush1.msra.mxu0 0.0
    %1436 = vmatprep.subr.mxu0 0.0
    %1437 = vmatpush1.msra.mxu0 0.0
    %1438 = vmatprep.subr.mxu0 0.0
    %1439 = vmatpush1.msra.mxu0 0.0
    %1440 = vmatprep.subr.mxu0 0.0
    %1441 = vmatpush1.msra.mxu0 0.0
    %1442 = vmatprep.subr.mxu0 0.0
    %1443 = vmatpush1.msra.mxu0 0.0
    %1444 = vmatprep.subr.mxu0 0.0
    %1445 = vmatpush1.msra.mxu0 0.0
    %1446 = vmatprep.subr.mxu0 0.0
    %1447 = vmatpush1.msra.mxu0 0.0
    %1448 = vmatprep.subr.mxu0 0.0
    %1449 = vmatpush1.msra.mxu0 0.0
    %1450 = vmatprep.subr.mxu0 0.0
    %1451 = vmatpush1.msra.mxu0 0.0
    %1452 = vmatprep.subr.mxu0 0.0
    %1453 = vmatpush1.msra.mxu0 0.0
    %1454 = vmatprep.subr.mxu0 0.0
    %1455 = vmatpush1.msra.mxu0 0.0
    %1456 = vmatprep.subr.mxu0 0.0
    %1457 = vmatpush1.msra.mxu0 0.0
    %1458 = vmatprep.subr.mxu0 0.0
    %1459 = vmatpush1.msra.mxu0 0.0
    %1460 = vmatprep.subr.mxu0 0.0
    %1461 = vmatpush1.msra.mxu0 0.0
    %1462 = vmatprep.subr.mxu0 0.0
    %1463 = vmatpush1.msra.mxu0 0.0
    %1464 = vmatprep.subr.mxu0 0.0
    %1465 = vmatpush1.msra.mxu0 0.0
    %1466 = vmatprep.subr.mxu0 0.0
    %1467 = vmatpush1.msra.mxu0 0.0
    %1468 = vmatprep.subr.mxu0 0.0
    %1469 = vmatpush1.msra.mxu0 0.0
    %1470 = vmatprep.subr.mxu0 0.0
    %1471 = vmatpush1.msra.mxu0 0.0
    %1472 = vmatprep.subr.mxu0 0.0
    %1473 = vmatpush1.msra.mxu0 0.0
    %1474 = vmatprep.subr.mxu0 0.0
    %1475 = vmatpush1.msra.mxu0 0.0
    %1476 = vmatprep.subr.mxu0 0.0
    %1477 = vmatpush1.msra.mxu0 0.0
    %1478 = vmatprep.subr.mxu0 0.0
    %1479 = vmatpush1.msra.mxu0 0.0
    %1480 = vmatprep.subr.mxu0 0.0
    %1481 = vmatpush1.msra.mxu0 0.0
    %1482 = vmatprep.subr.mxu0 0.0
    %1483 = vmatpush1.msra.mxu0 0.0
    %1484 = vmatprep.subr.mxu0 0.0
    %1485 = vmatpush1.msra.mxu0 0.0
    %1486 = vmatprep.subr.mxu0 0.0
    %1487 = vmatpush1.msra.mxu0 0.0
    %1488 = vmatprep.mubr.f32.mxu0 0.0
    %1489 = vmatmul.mubr.f32.gmra.mrb[0].mxu0 %v1413
    %v1490 = vpop.f32.mrb[0].mxu0
    %v1491 = vadd.f32 %v1411, %v1490
    %v1492 = vpop.f32.mrb[0].mxu0
    %1493 = vmatprep.mubr.f32.mxu0 0.0
    %1494 = vmatmul.mubr.f32.gmra.mrb[0].mxu0 %v1416
    %v1495 = vpop.f32.mrb[0].mxu0
    %v1496 = vadd.f32 %v1411, %v1495
    %v1497 = vpop.f32.mrb[0].mxu0
    %1498 = vmatprep.mubr.f32.mxu0 0.0
    %1499 = vmatmul.mubr.f32.gmra.mrb[0].mxu0 %v1419
    %v1500 = vpop.f32.mrb[0].mxu0
    %v1501 = vadd.f32 %v1411, %v1500
    %v1502 = vpop.f32.mrb[0].mxu0
    %1503 = vmatprep.mubr.f32.mxu0 0.0
    %1504 = vmatmul.mubr.f32.gmra.mrb[0].mxu0 %v1422
    %v1505 = vpop.f32.mrb[0].mxu0
    %v1506 = vadd.f32 %v1411, %v1505
    %v1507 = vpop.f32.mrb[0].mxu0
    %1508 = vdwg.mxu0
    %v1509 = vmul.f32 %v1491, 0.5
    %v1510 = vmul.f32 %v1496, 0.5
    %v1511 = vmul.f32 %v1501, 0.5
    %v1512 = vmul.f32 %v1506, 0.5
    %v1513 = vmul.f32 %v1491, 0.044715
    %v1514 = vmul.f32 %v1496, 0.044715
    %v1515 = vmul.f32 %v1501, 0.044715
    %v1516 = vmul.f32 %v1506, 0.044715
    %v1517 = vmul.f32 %v1513, %v1491
    %v1518 = vmul.f32 %v1514, %v1496
    %v1519 = vmul.f32 %v1515, %v1501
    %v1520 = vmul.f32 %v1516, %v1506
    %v1521 = vmul.f32 %v1517, %v1491
    %v1522 = vmul.f32 %v1518, %v1496
    %v1523 = vmul.f32 %v1519, %v1501
    %v1524 = vmul.f32 %v1520, %v1506
    %v1525 = vadd.f32 %v1491, %v1521
    %v1526 = vadd.f32 %v1496, %v1522
    %v1527 = vadd.f32 %v1501, %v1523
    %v1528 = vadd.f32 %v1506, %v1524
    %v1529 = vmul.f32 %v1525, 0.7978846
    %v1530 = vmul.f32 %v1526, 0.7978846
    %v1531 = vmul.f32 %v1527, 0.7978846
    %v1532 = vmul.f32 %v1528, 0.7978846
    %v1533 = vtanh.pop %v1529
    %v1534 = vtanh.pop %v1530
    %v1535 = vtanh.pop %v1531
    %v1536 = vtanh.pop %v1532
    %v1537 = vadd.f32 %v1533, 1.0
    %v1538 = vadd.f32 %v1534, 1.0
    %v1539 = vadd.f32 %v1535, 1.0
    %v1540 = vadd.f32 %v1536, 1.0
    %v1541 = vmul.f32 %v1509, %v1537
    %v1542 = vmul.f32 %v1510, %v1538
    %v1543 = vmul.f32 %v1511, %v1539
    %v1544 = vmul.f32 %v1512, %v1540
    %v1545 = vlaneseq
    %v1546 = vshrl.u32 %v1545, 7
    %v1547 = vsub.s32 2, %v1546
    %v1548 = vrot.slane %v16, %v1547
    %1549 = vmatprep.subr.mxu0 0.0
    %1550 = vmatpush1.msra.mxu0 %v1392
    %1551 = vmatprep.subr.mxu0 0.0
    %1552 = vmatpush1.msra.mxu0 %v1393
    %1553 = vmatprep.subr.mxu0 0.0
    %1554 = vmatpush1.msra.mxu0 %v1394
    %1555 = vmatprep.subr.mxu0 0.0
    %1556 = vmatpush1.msra.mxu0 %v1395
    %1557 = vmatprep.subr.mxu0 0.0
    %1558 = vmatpush1.msra.mxu0 %v1396
    %1559 = vmatprep.subr.mxu0 0.0
    %1560 = vmatpush1.msra.mxu0 %v1397
    %1561 = vmatprep.subr.mxu0 0.0
    %1562 = vmatpush1.msra.mxu0 %v1398
    %1563 = vmatprep.subr.mxu0 0.0
    %1564 = vmatpush1.msra.mxu0 %v1399
    %1565 = vmatprep.subr.mxu0 0.0
    %1566 = vmatpush1.msra.mxu0 %v1400
    %1567 = vmatprep.subr.mxu0 0.0
    %1568 = vmatpush1.msra.mxu0 %v1401
    %1569 = vmatprep.subr.mxu0 0.0
    %1570 = vmatpush1.msra.mxu0 %v1402
    %1571 = vmatprep.subr.mxu0 0.0
    %1572 = vmatpush1.msra.mxu0 %v1403
    %1573 = vmatprep.subr.mxu0 0.0
    %1574 = vmatpush1.msra.mxu0 %v1404
    %1575 = vmatprep.subr.mxu0 0.0
    %1576 = vmatpush1.msra.mxu0 %v1405
    %1577 = vmatprep.subr.mxu0 0.0
    %1578 = vmatpush1.msra.mxu0 %v1406
    %1579 = vmatprep.subr.mxu0 0.0
    %1580 = vmatpush1.msra.mxu0 %v1407
    %1581 = vmatprep.subr.mxu0 0.0
    %1582 = vmatpush1.msra.mxu0 0.0
    %1583 = vmatprep.subr.mxu0 0.0
    %1584 = vmatpush1.msra.mxu0 0.0
    %1585 = vmatprep.subr.mxu0 0.0
    %1586 = vmatpush1.msra.mxu0 0.0
    %1587 = vmatprep.subr.mxu0 0.0
    %1588 = vmatpush1.msra.mxu0 0.0
    %1589 = vmatprep.subr.mxu0 0.0
    %1590 = vmatpush1.msra.mxu0 0.0
    %1591 = vmatprep.subr.mxu0 0.0
    %1592 = vmatpush1.msra.mxu0 0.0
    %1593 = vmatprep.subr.mxu0 0.0
    %1594 = vmatpush1.msra.mxu0 0.0
    %1595 = vmatprep.subr.mxu0 0.0
    %1596 = vmatpush1.msra.mxu0 0.0
    %1597 = vmatprep.subr.mxu0 0.0
    %1598 = vmatpush1.msra.mxu0 0.0
    %1599 = vmatprep.subr.mxu0 0.0
    %1600 = vmatpush1.msra.mxu0 0.0
    %1601 = vmatprep.subr.mxu0 0.0
    %1602 = vmatpush1.msra.mxu0 0.0
    %1603 = vmatprep.subr.mxu0 0.0
    %1604 = vmatpush1.msra.mxu0 0.0
    %1605 = vmatprep.subr.mxu0 0.0
    %1606 = vmatpush1.msra.mxu0 0.0
    %1607 = vmatprep.subr.mxu0 0.0
    %1608 = vmatpush1.msra.mxu0 0.0
    %1609 = vmatprep.subr.mxu0 0.0
    %1610 = vmatpush1.msra.mxu0 0.0
    %1611 = vmatprep.subr.mxu0 0.0
    %1612 = vmatpush1.msra.mxu0 0.0
    %1613 = vmatprep.mubr.f32.mxu0 0.0
    %1614 = vmatmul.mubr.f32.gmra.mrb[0].mxu0 %v1541
    %v1615 = vpop.f32.mrb[0].mxu0
    %v1616 = vadd.f32 %v1548, %v1615
    %v1617 = vpop.f32.mrb[0].mxu0
    %1618 = vmatprep.mubr.f32.mxu0 0.0
    %1619 = vmatmul.mubr.f32.gmra.mrb[0].mxu0 %v1542
    %v1620 = vpop.f32.mrb[0].mxu0
    %v1621 = vadd.f32 %v1548, %v1620
    %v1622 = vpop.f32.mrb[0].mxu0
    %1623 = vmatprep.mubr.f32.mxu0 0.0
    %1624 = vmatmul.mubr.f32.gmra.mrb[0].mxu0 %v1543
    %v1625 = vpop.f32.mrb[0].mxu0
    %v1626 = vadd.f32 %v1548, %v1625
    %v1627 = vpop.f32.mrb[0].mxu0
    %1628 = vmatprep.mubr.f32.mxu0 0.0
    %1629 = vmatmul.mubr.f32.gmra.mrb[0].mxu0 %v1544
    %v1630 = vpop.f32.mrb[0].mxu0
    %v1631 = vadd.f32 %v1548, %v1630
    %v1632 = vpop.f32.mrb[0].mxu0
    %1633 = vdwg.mxu0
    %v1634 = vadd.f32 %v1316, %v1616
    %v1635 = vadd.f32 %v1317, %v1621
    %v1636 = vadd.f32 %v1318, %v1626
    %v1637 = vadd.f32 %v1319, %v1631
    %v1638 = vsel %vm131, %v1634, 0.0
    %1639 = vadd.xlane.f32.xlu0 %v1638
    %v1640 = vpop.xlane.xlu0 %1639
    %v1641 = vsel %vm131, %v1635, 0.0
    %1642 = vadd.xlane.f32.xlu0 %v1641
    %v1643 = vpop.xlane.xlu0 %1642
    %v1644 = vsel %vm131, %v1636, 0.0
    %1645 = vadd.xlane.f32.xlu0 %v1644
    %v1646 = vpop.xlane.xlu0 %1645
    %v1647 = vsel %vm131, %v1637, 0.0
    %1648 = vadd.xlane.f32.xlu0 %v1647
    %v1649 = vpop.xlane.xlu0 %1648
    %v1650 = vmul.f32 %v1640, %v144
    %v1651 = vmul.f32 %v1643, %v144
    %v1652 = vmul.f32 %v1646, %v144
    %v1653 = vmul.f32 %v1649, %v144
    %v1654 = vsub.f32 %v1634, %v1650
    %v1655 = vsub.f32 %v1635, %v1651
    %v1656 = vsub.f32 %v1636, %v1652
    %v1657 = vsub.f32 %v1637, %v1653
    %v1658 = vmul.f32 %v1654, %v1654
    %v1659 = vmul.f32 %v1655, %v1655
    %v1660 = vmul.f32 %v1656, %v1656
    %v1661 = vmul.f32 %v1657, %v1657
    %v1662 = vsel %vm131, %v1658, 0.0
    %1663 = vadd.xlane.f32.xlu0 %v1662
    %v1664 = vpop.xlane.xlu0 %1663
    %v1665 = vsel %vm131, %v1659, 0.0
    %1666 = vadd.xlane.f32.xlu0 %v1665
    %v1667 = vpop.xlane.xlu0 %1666
    %v1668 = vsel %vm131, %v1660, 0.0
    %1669 = vadd.xlane.f32.xlu0 %v1668
    %v1670 = vpop.xlane.xlu0 %1669
    %v1671 = vsel %vm131, %v1661, 0.0
    %1672 = vadd.xlane.f32.xlu0 %v1671
    %v1673 = vpop.xlane.xlu0 %1672
    %v1674 = vmul.f32 %v1664, %v144
    %v1675 = vmul.f32 %v1667, %v144
    %v1676 = vmul.f32 %v1670, %v144
    %v1677 = vmul.f32 %v1673, %v144
    %v1678 = vadd.f32 %v1674, 1e-05
    %v1679 = vadd.f32 %v1675, 1e-05
    %v1680 = vadd.f32 %v1676, 1e-05
    %v1681 = vadd.f32 %v1677, 1e-05
    %v1682 = vrsqrt.pop %v1678
    %v1683 = vrsqrt.pop %v1679
    %v1684 = vrsqrt.pop %v1680
    %v1685 = vrsqrt.pop %v1681
    %v1686 = vmul.f32 %v1654, %v1682
    %v1687 = vmul.f32 %v1655, %v1683
    %v1688 = vmul.f32 %v1656, %v1684
    %v1689 = vmul.f32 %v1657, %v1685
    %v1690 = vlaneseq
    %v1691 = vshrl.u32 %v1690, 7
    %v1692 = vsub.s32 3, %v1691
    %v1693 = vrot.slane %v16, %v1692
    %v1694 = vmul.f32 %v1686, %v1693
    %v1695 = vmul.f32 %v1687, %v1693
    %v1696 = vmul.f32 %v1688, %v1693
    %v1697 = vmul.f32 %v1689, %v1693
    %v1698 = vlaneseq
    %v1699 = vshrl.u32 %v1698, 7
    %v1700 = vsub.s32 4, %v1699
    %v1701 = vrot.slane %v16, %v1700
    %v1702 = vadd.f32 %v1694, %v1701
    %v1703 = vadd.f32 %v1695, %v1701
    %v1704 = vadd.f32 %v1696, %v1701
    %v1705 = vadd.f32 %v1697, %v1701
    %v1707 = vrot.slane %v16, 6
    %v1708 = vsel %vm131, %v1707, 0
    %1710 = vmatprep.subr.mxu0 0.0
    %1711 = vmatpush1.msra.mxu0 %v1702
    %1712 = vmatprep.subr.mxu0 0.0
    %1713 = vmatpush1.msra.mxu0 %v1703
    %1714 = vmatprep.subr.mxu0 0.0
    %1715 = vmatpush1.msra.mxu0 %v1704
    %1716 = vmatprep.subr.mxu0 0.0
    %1717 = vmatpush1.msra.mxu0 %v1705
    %1718 = vmatprep.subr.mxu0 0.0
    %1719 = vmatpush1.msra.mxu0 0.0
    %1720 = vmatprep.subr.mxu0 0.0
    %1721 = vmatpush1.msra.mxu0 0.0
    %1722 = vmatprep.subr.mxu0 0.0
    %1723 = vmatpush1.msra.mxu0 0.0
    %1724 = vmatprep.subr.mxu0 0.0
    %1725 = vmatpush1.msra.mxu0 0.0
    %1726 = vmatprep.subr.mxu0 0.0
    %1727 = vmatpush1.msra.mxu0 0.0
    %1728 = vmatprep.subr.mxu0 0.0
    %1729 = vmatpush1.msra.mxu0 0.0
    %1730 = vmatprep.subr.mxu0 0.0
    %1731 = vmatpush1.msra.mxu0 0.0
    %1732 = vmatprep.subr.mxu0 0.0
    %1733 = vmatpush1.msra.mxu0 0.0
    %1734 = vmatprep.subr.mxu0 0.0
    %1735 = vmatpush1.msra.mxu0 0.0
    %1736 = vmatprep.subr.mxu0 0.0
    %1737 = vmatpush1.msra.mxu0 0.0
    %1738 = vmatprep.subr.mxu0 0.0
    %1739 = vmatpush1.msra.mxu0 0.0
    %1740 = vmatprep.subr.mxu0 0.0
    %1741 = vmatpush1.msra.mxu0 0.0
    %1742 = vmatprep.subr.mxu0 0.0
    %1743 = vmatpush1.msra.mxu0 0.0
    %1744 = vmatprep.subr.mxu0 0.0
    %1745 = vmatpush1.msra.mxu0 0.0
    %1746 = vmatprep.subr.mxu0 0.0
    %1747 = vmatpush1.msra.mxu0 0.0
    %1748 = vmatprep.subr.mxu0 0.0
    %1749 = vmatpush1.msra.mxu0 0.0
    %1750 = vmatprep.subr.mxu0 0.0
    %1751 = vmatpush1.msra.mxu0 0.0
    %1752 = vmatprep.subr.mxu0 0.0
    %1753 = vmatpush1.msra.mxu0 0.0
    %1754 = vmatprep.subr.mxu0 0.0
    %1755 = vmatpush1.msra.mxu0 0.0
    %1756 = vmatprep.subr.mxu0 0.0
    %1757 = vmatpush1.msra.mxu0 0.0
    %1758 = vmatprep.subr.mxu0 0.0
    %1759 = vmatpush1.msra.mxu0 0.0
    %1760 = vmatprep.subr.mxu0 0.0
    %1761 = vmatpush1.msra.mxu0 0.0
    %1762 = vmatprep.subr.mxu0 0.0
    %1763 = vmatpush1.msra.mxu0 0.0
    %1764 = vmatprep.subr.mxu0 0.0
    %1765 = vmatpush1.msra.mxu0 0.0
    %1766 = vmatprep.subr.mxu0 0.0
    %1767 = vmatpush1.msra.mxu0 0.0
    %1768 = vmatprep.subr.mxu0 0.0
    %1769 = vmatpush1.msra.mxu0 0.0
    %1770 = vmatprep.subr.mxu0 0.0
    %1771 = vmatpush1.msra.mxu0 0.0
    %1772 = vmatprep.subr.mxu0 0.0
    %1773 = vmatpush1.msra.mxu0 0.0
    %1774 = vmatprep.mubr.f32.mxu0 0.0
    %1775 = vmatmul.mubr.f32.gmra.mrb[0].mxu0 %v1708
    %v1776 = vpop.f32.mrb[0].mxu0
    %v1777 = vadd.f32 0.0, %v1776
    %v1778 = vpop.f32.mrb[0].mxu0
    %1779 = vdwg.mxu0
    %v1780 = vld [vmem:[%s1 + $0x120] sm:$0xff]
    %v1781 = vld [vmem:[%s1 + $0x128] sm:$0xff]
    %v1782 = vld [vmem:[%s1 + $0x130] sm:$0xff]
    %v1783 = vld [vmem:[%s1 + $0x138] sm:$0xff]
    %v1784 = vlaneseq
    %v1785 = vshrl.u32 %v1784, 7
    %v1786 = vsub.s32 5, %v1785
    %v1787 = vrot.slane %v16, %v1786
    %v1789 = vsel %vm131, %v1777, 0
    %1791 = vmatprep.subr.mxu0 0.0
    %1792 = vmatpush1.msra.mxu0 %v1780
    %1793 = vmatprep.subr.mxu0 0.0
    %1794 = vmatpush1.msra.mxu0 %v1781
    %1795 = vmatprep.subr.mxu0 0.0
    %1796 = vmatpush1.msra.mxu0 %v1782
    %1797 = vmatprep.subr.mxu0 0.0
    %1798 = vmatpush1.msra.mxu0 %v1783
    %1799 = vmatprep.subr.mxu0 0.0
    %1800 = vmatpush1.msra.mxu0 0.0
    %1801 = vmatprep.subr.mxu0 0.0
    %1802 = vmatpush1.msra.mxu0 0.0
    %1803 = vmatprep.subr.mxu0 0.0
    %1804 = vmatpush1.msra.mxu0 0.0
    %1805 = vmatprep.subr.mxu0 0.0
    %1806 = vmatpush1.msra.mxu0 0.0
    %1807 = vmatprep.subr.mxu0 0.0
    %1808 = vmatpush1.msra.mxu0 0.0
    %1809 = vmatprep.subr.mxu0 0.0
    %1810 = vmatpush1.msra.mxu0 0.0
    %1811 = vmatprep.subr.mxu0 0.0
    %1812 = vmatpush1.msra.mxu0 0.0
    %1813 = vmatprep.subr.mxu0 0.0
    %1814 = vmatpush1.msra.mxu0 0.0
    %1815 = vmatprep.subr.mxu0 0.0
    %1816 = vmatpush1.msra.mxu0 0.0
    %1817 = vmatprep.subr.mxu0 0.0
    %1818 = vmatpush1.msra.mxu0 0.0
    %1819 = vmatprep.subr.mxu0 0.0
    %1820 = vmatpush1.msra.mxu0 0.0
    %1821 = vmatprep.subr.mxu0 0.0
    %1822 = vmatpush1.msra.mxu0 0.0
    %1823 = vmatprep.subr.mxu0 0.0
    %1824 = vmatpush1.msra.mxu0 0.0
    %1825 = vmatprep.subr.mxu0 0.0
    %1826 = vmatpush1.msra.mxu0 0.0
    %1827 = vmatprep.subr.mxu0 0.0
    %1828 = vmatpush1.msra.mxu0 0.0
    %1829 = vmatprep.subr.mxu0 0.0
    %1830 = vmatpush1.msra.mxu0 0.0
    %1831 = vmatprep.subr.mxu0 0.0
    %1832 = vmatpush1.msra.mxu0 0.0
    %1833 = vmatprep.subr.mxu0 0.0
    %1834 = vmatpush1.msra.mxu0 0.0
    %1835 = vmatprep.subr.mxu0 0.0
    %1836 = vmatpush1.msra.mxu0 0.0
    %1837 = vmatprep.subr.mxu0 0.0
    %1838 = vmatpush1.msra.mxu0 0.0
    %1839 = vmatprep.subr.mxu0 0.0
    %1840 = vmatpush1.msra.mxu0 0.0
    %1841 = vmatprep.subr.mxu0 0.0
    %1842 = vmatpush1.msra.mxu0 0.0
    %1843 = vmatprep.subr.mxu0 0.0
    %1844 = vmatpush1.msra.mxu0 0.0
    %1845 = vmatprep.subr.mxu0 0.0
    %1846 = vmatpush1.msra.mxu0 0.0
    %1847 = vmatprep.subr.mxu0 0.0
    %1848 = vmatpush1.msra.mxu0 0.0
    %1849 = vmatprep.subr.mxu0 0.0
    %1850 = vmatpush1.msra.mxu0 0.0
    %1851 = vmatprep.subr.mxu0 0.0
    %1852 = vmatpush1.msra.mxu0 0.0
    %1853 = vmatprep.subr.mxu0 0.0
    %1854 = vmatpush1.msra.mxu0 0.0
    %1855 = vmatprep.mubr.f32.mxu0 0.0
    %1856 = vmatmul.mubr.f32.gmra.mrb[0].mxu0 %v1789
    %v1857 = vpop.f32.mrb[0].mxu0
    %v1858 = vadd.f32 %v1787, %v1857
    %v1859 = vpop.f32.mrb[0].mxu0
    %1860 = vdwg.mxu0
    %1861 = vst [vmem:[#allocation2] sm:$0x3] %v1858
    // Predicated region
    $region14: #{_lambda_.1} parent=1 // pred_check
      _
    $region15: #{_lambda_.1} parent=1 // pred_check_branch
      %1863 = sbr.rel (0) target = $region17
    $region16: #{_lambda_.1} parent=1 // pred_region
      %s1865 = ssub.s32 32, 32
      %1866 = vsyncadd [#allocation3], %s1865
      %s1868 = sshll.u32 [#allocation2], 4
      %s1869 = int_to_ptr.vmem [resolvable:$true] %s1868
      %1871 = dma.vmem_to_hbm [thread:$0]  %s1869, 32, %s3, [#allocation3]
    $region17: #{_lambda_.1} parent=1 // pred_fallthru
      _
    // Predicated region
    $region18: #{_lambda_.1} parent=1 // pred_check
      _
    $region19: #{_lambda_.1} parent=1 // pred_check_branch
      %1873 = sbr.rel (0) target = $region21
    $region20: #{_lambda_.1} parent=1 // pred_region
      %1874 = dma.done [#allocation3], 32
    $region21: #{_lambda_.1} parent=1 // pred_fallthru
      _
    %1875 = vsyncpa [#allocation3], 1

</llo_original>
